<compile_context>
chip_gen: v7x
topology: tpu7x:2x2x1
jax: 0.10.0
libtpu: 0.0.40
codegen_flags: <defaults>
</compile_context>

<pallas_src>
import functools

import numpy as np
import jax
import jax.numpy as jnp
from jax.experimental import pallas as pl
from jax.experimental.pallas import tpu as pltpu

EPS = 1e-5


# ----------------------------------------------------------------------------
# Fused Pallas kernel
# ----------------------------------------------------------------------------
def _basic_block_kernel(x_ref, masks_ref, w1_ref, w2_ref, g1_ref, b1_ref,
                        g2_ref, b2_ref, o_ref, *, n, c, h, w, deltas):
    nc, hw = n * c, h * w
    inv_cnt = 1.0 / float(n * hw)
    taps = [(dy, dx) for dy in (-1, 0, 1) for dx in (-1, 0, 1)]

    x2d = x_ref[...]                                    # (N*C, H*W) lane-dense

    def conv3x3(src, wd_ref):
        # out[r, p] = sum_{k, s} Wbig_k[r, s] * (mask_k * lane_roll_k(src))[s, p]
        # realized as a sum over the structurally non-zero sublane diagonals of
        # the block-diagonal weight: full-(8,256) VPU MACs, shifts on the XLU.
        acc = jnp.zeros((nc, hw), jnp.float32)
        for k, (dy, dx) in enumerate(taps):
            sh = dy * w + dx
            if sh == 0:
                base = src                              # centre tap: no shift, no mask
            else:
                base = masks_ref[k] * pltpu.roll(src, shift=(-sh) % hw, axis=1)
            wk = wd_ref[k]                              # (N*C, N*C): [row, delta]
            for d in deltas:
                rolled = base if d == 0 else pltpu.roll(base, shift=d, axis=0)
                acc = acc + wk[:, d:d + 1] * rolled     # (N*C,1) x (N*C,H*W)
        return acc

    def batchnorm(y, g_ref, b_ref):
        # Single-pass stats: sum and sum-of-squares together (one sweep), then
        # fold the N image rows of each channel with a sublane roll.
        s1 = jnp.sum(y, axis=1, keepdims=True)          # (N*C, 1)
        s2 = jnp.sum(y * y, axis=1, keepdims=True)
        t1, t2 = s1, s2
        for i in range(1, n):
            t1 = t1 + pltpu.roll(s1, shift=i * c, axis=0)
            t2 = t2 + pltpu.roll(s2, shift=i * c, axis=0)
        mean = t1 * inv_cnt
        var = t2 * inv_cnt - mean * mean                # biased (training-mode BN)
        scale = g_ref[...] * jax.lax.rsqrt(var + EPS)   # (N*C, 1)
        shift = b_ref[...] - mean * scale
        return y * scale + shift

    # conv1 -> bn1 -> relu (stays entirely in vregs/VMEM values)
    y1 = jnp.maximum(batchnorm(conv3x3(x2d, w1_ref), g1_ref, b1_ref), 0.0)
    # conv2 -> bn2 -> (+ identity) -> relu
    y2 = batchnorm(conv3x3(y1, w2_ref), g2_ref, b2_ref)
    o_ref[...] = jnp.maximum(y2 + x2d, 0.0)


# ----------------------------------------------------------------------------
# Wrapper-side layout glue (all tiny / constant-folded)
# ----------------------------------------------------------------------------
def _diag_weights(w_oihw, n):
    """PyTorch (C, C, 3, 3) -> (9, N*C, N*C) diagonal form [tap, row, delta]."""
    c = w_oihw.shape[0]
    nc = n * c
    w_taps = jnp.transpose(w_oihw, (2, 3, 0, 1)).reshape(9, c, c)        # [k, co, ci]
    eye = jnp.eye(n, dtype=w_oihw.dtype)
    wbig = jnp.einsum("ab,kij->kaibj", eye, w_taps).reshape(9, nc, nc)   # block diag
    r = jnp.arange(nc)
    cols = [wbig[:, r, (r - d) % nc] for d in range(nc)]                 # each (9, nc)
    return jnp.stack(cols, axis=-1)                                      # [k, row, d]


def _nonzero_deltas(n, c):
    """Sublane diagonals of the block-diagonal weight that are not all-zero."""
    nc = n * c
    out = []
    for d in range(nc):
        r = np.arange(nc)
        s = (r - d) % nc
        if np.any(r // c == s // c):
            out.append(d)
    return tuple(out)


def _tap_masks(n, c, h, w):
    """(9, N*C, H*W) f32 boundary masks; data-independent -> XLA constant."""
    hw = h * w
    pos = np.arange(hw)
    yy, xx = pos // w, pos % w
    ms = []
    for dy in (-1, 0, 1):
        for dx in (-1, 0, 1):
            valid = ((yy + dy >= 0) & (yy + dy < h) &
                     (xx + dx >= 0) & (xx + dx < w)).astype(np.float32)
            ms.append(np.broadcast_to(valid, (n * c, hw)))
    return jnp.asarray(np.stack(ms))


def _full_spec(shape):
    zeros = (0,) * len(shape)
    return pl.BlockSpec(shape, lambda i: zeros)


@jax.jit
def basic_block_forward(x_nchw, params):
    n, c_in, h, w = x_nchw.shape
    c_out = params["conv1_w"].shape[0]
    assert c_in == c_out, "identity shortcut only (downsample=None)"
    c = c_out
    nc, hw = n * c, h * w
    # TODO(synk): stride>1 / downsample not covered by this instantiation.

    # NCHW -> (N*C, H*W): contiguous reshape only (no transpose, no HBM pad).
    x2d = x_nchw.astype(jnp.float32).reshape(nc, hw)

    masks = _tap_masks(n, c, h, w)
    w1 = _diag_weights(params["conv1_w"].astype(jnp.float32), n)
    w2 = _diag_weights(params["conv2_w"].astype(jnp.float32), n)

    def tile_param(p):
        return jnp.tile(p.astype(jnp.float32).reshape(1, c), (n, 1)).reshape(nc, 1)

    g1, b1 = tile_param(params["bn1_gamma"]), tile_param(params["bn1_beta"])
    g2, b2 = tile_param(params["bn2_gamma"]), tile_param(params["bn2_beta"])

    kernel = functools.partial(_basic_block_kernel, n=n, c=c, h=h, w=w,
                               deltas=_nonzero_deltas(n, c))

    out2d = pl.pallas_call(
        kernel,
        out_shape=jax.ShapeDtypeStruct((nc, hw), jnp.float32),
        grid=(1,),
        in_specs=[_full_spec(x2d.shape), _full_spec(masks.shape),
                  _full_spec(w1.shape), _full_spec(w2.shape),
                  _full_spec(g1.shape), _full_spec(b1.shape),
                  _full_spec(g2.shape), _full_spec(b2.shape)],
        out_specs=_full_spec((nc, hw)),
    )(x2d, masks, w1, w2, g1, b1, g2, b2)

    # Lane-dense (N*C, H*W) -> NCHW: contiguous reshape only.
    return out2d.reshape(n, c, h, w)


# ----------------------------------------------------------------------------
# Pure-JAX reference (correctness check)
# ----------------------------------------------------------------------------
def _ref_forward(x_nchw, params):
    def conv3x3(x, wgt):
        return jax.lax.conv_general_dilated(
            x, wgt, window_strides=(1, 1), padding=((1, 1), (1, 1)),
            dimension_numbers=("NCHW", "OIHW", "NCHW"))

    def bn_train(x, gamma, beta):
        mean = jnp.mean(x, axis=(0, 2, 3), keepdims=True)
        var = jnp.mean((x - mean) ** 2, axis=(0, 2, 3), keepdims=True)
        xh = (x - mean) * jax.lax.rsqrt(var + EPS)
        return xh * gamma.reshape(1, -1, 1, 1) + beta.reshape(1, -1, 1, 1)

    out = conv3x3(x_nchw, params["conv1_w"])
    out = jnp.maximum(bn_train(out, params["bn1_gamma"], params["bn1_beta"]), 0.0)
    out = conv3x3(out, params["conv2_w"])
    out = bn_train(out, params["bn2_gamma"], params["bn2_beta"])
    return jnp.maximum(out + x_nchw, 0.0)


# ----------------------------------------------------------------------------
# Main
# ----------------------------------------------------------------------------
if __name__ == "__main__":
    N, Cin, H, W = 2, 4, 16, 16
    Cout = 4  # BasicBlock(in_channels=4, out_channels=4, stride=1, downsample=None)

    key = jax.random.PRNGKey(0)
    k_x, k_w1, k_w2, k_g1, k_b1, k_g2, k_b2 = jax.random.split(key, 7)

    x = jax.random.normal(k_x, (N, Cin, H, W), dtype=jnp.float32)
    params = {
        "conv1_w": 0.1 * jax.random.normal(k_w1, (Cout, Cin, 3, 3), dtype=jnp.float32),
        "conv2_w": 0.1 * jax.random.normal(k_w2, (Cout, Cout, 3, 3), dtype=jnp.float32),
        "bn1_gamma": 1.0 + 0.1 * jax.random.normal(k_g1, (Cout,), dtype=jnp.float32),
        "bn1_beta": 0.1 * jax.random.normal(k_b1, (Cout,), dtype=jnp.float32),
        "bn2_gamma": 1.0 + 0.1 * jax.random.normal(k_g2, (Cout,), dtype=jnp.float32),
        "bn2_beta": 0.1 * jax.random.normal(k_b2, (Cout,), dtype=jnp.float32),
    }

    out = jax.block_until_ready(basic_block_forward(x, params))
    ref = jax.block_until_ready(_ref_forward(x, params))

    assert out.shape == (N, Cout, H, W), out.shape
    assert jnp.allclose(out, ref, rtol=1e-4, atol=1e-4), float(jnp.max(jnp.abs(out - ref)))
    print("KERNEL_OK")
</pallas_src>

<mosaic_0001>
module attributes {stable_mosaic.version = 11 : i64} {
  func.func @_basic_block_kernel(%arg0: i32, %arg1: memref<8x256xf32, #tpu.memory_space<vmem>>, %arg2: memref<9x8x256xf32, #tpu.memory_space<vmem>>, %arg3: memref<9x8x8xf32, #tpu.memory_space<vmem>>, %arg4: memref<9x8x8xf32, #tpu.memory_space<vmem>>, %arg5: memref<8x1xf32, #tpu.memory_space<vmem>>, %arg6: memref<8x1xf32, #tpu.memory_space<vmem>>, %arg7: memref<8x1xf32, #tpu.memory_space<vmem>>, %arg8: memref<8x1xf32, #tpu.memory_space<vmem>>, %arg9: memref<8x256xf32, #tpu.memory_space<vmem>>) attributes {dimension_semantics = [#tpu.dimension_semantics<arbitrary>], iteration_bounds = array<i64: 1>, scalar_prefetch = 0 : i64, scratch_operands = 0 : i64, tpu.core_type = #tpu.core_type<tc>, window_params = [{pipeline_mode = #tpu.pipeline_mode<synchronous>, transform_indices = @transform_0, window_bounds = array<i64: 8, 256>}, {pipeline_mode = #tpu.pipeline_mode<synchronous>, transform_indices = @transform_1, window_bounds = array<i64: 9, 8, 256>}, {pipeline_mode = #tpu.pipeline_mode<synchronous>, transform_indices = @transform_2, window_bounds = array<i64: 9, 8, 8>}, {pipeline_mode = #tpu.pipeline_mode<synchronous>, transform_indices = @transform_3, window_bounds = array<i64: 9, 8, 8>}, {pipeline_mode = #tpu.pipeline_mode<synchronous>, transform_indices = @transform_4, window_bounds = array<i64: 8, 1>}, {pipeline_mode = #tpu.pipeline_mode<synchronous>, transform_indices = @transform_5, window_bounds = array<i64: 8, 1>}, {pipeline_mode = #tpu.pipeline_mode<synchronous>, transform_indices = @transform_6, window_bounds = array<i64: 8, 1>}, {pipeline_mode = #tpu.pipeline_mode<synchronous>, transform_indices = @transform_7, window_bounds = array<i64: 8, 1>}, {pipeline_mode = #tpu.pipeline_mode<synchronous>, transform_indices = @transform_8, window_bounds = array<i64: 8, 256>}]} {
    %c0 = arith.constant 0 : index
    %c0_0 = arith.constant 0 : index
    %0 = vector.load %arg1[%c0, %c0_0] : memref<8x256xf32, #tpu.memory_space<vmem>>, vector<8x256xf32>
    %cst = arith.constant 0.000000e+00 : f32
    %1 = vector.broadcast %cst : f32 to vector<8x256xf32>
    %c0_1 = arith.constant 0 : index
    %c0_2 = arith.constant 0 : index
    %c0_3 = arith.constant 0 : index
    %2 = vector.load %arg2[%c0_1, %c0_2, %c0_3] : memref<9x8x256xf32, #tpu.memory_space<vmem>>, vector<1x8x256xf32>
    %3 = vector.shape_cast %2 : vector<1x8x256xf32> to vector<8x256xf32>
    %c17_i32 = arith.constant 17 : i32
    %4 = tpu.dynamic_rotate %0 by %c17_i32 dim 1 : vector<8x256xf32>, i32 -> vector<8x256xf32>
    %5 = arith.mulf %3, %4 : vector<8x256xf32>
    %c0_4 = arith.constant 0 : index
    %c0_5 = arith.constant 0 : index
    %c0_6 = arith.constant 0 : index
    %6 = vector.load %arg3[%c0_4, %c0_5, %c0_6] : memref<9x8x8xf32, #tpu.memory_space<vmem>>, vector<1x8x8xf32>
    %7 = vector.shape_cast %6 : vector<1x8x8xf32> to vector<8x8xf32>
    %8 = vector.extract_strided_slice %7 {offsets = [0, 0], sizes = [8, 1], strides = [1, 1]} : vector<8x8xf32> to vector<8x1xf32>
    %9 = vector.broadcast %8 : vector<8x1xf32> to vector<8x256xf32>
    %10 = arith.mulf %9, %5 : vector<8x256xf32>
    %11 = arith.addf %1, %10 : vector<8x256xf32>
    %c1_i32 = arith.constant 1 : i32
    %12 = tpu.dynamic_rotate %5 by %c1_i32 dim 0 : vector<8x256xf32>, i32 -> vector<8x256xf32>
    %13 = vector.extract_strided_slice %7 {offsets = [0, 1], sizes = [8, 1], strides = [1, 1]} : vector<8x8xf32> to vector<8x1xf32>
    %14 = vector.broadcast %13 : vector<8x1xf32> to vector<8x256xf32>
    %15 = arith.mulf %14, %12 : vector<8x256xf32>
    %16 = arith.addf %11, %15 : vector<8x256xf32>
    %c2_i32 = arith.constant 2 : i32
    %17 = tpu.dynamic_rotate %5 by %c2_i32 dim 0 : vector<8x256xf32>, i32 -> vector<8x256xf32>
    %18 = vector.extract_strided_slice %7 {offsets = [0, 2], sizes = [8, 1], strides = [1, 1]} : vector<8x8xf32> to vector<8x1xf32>
    %19 = vector.broadcast %18 : vector<8x1xf32> to vector<8x256xf32>
    %20 = arith.mulf %19, %17 : vector<8x256xf32>
    %21 = arith.addf %16, %20 : vector<8x256xf32>
    %c3_i32 = arith.constant 3 : i32
    %22 = tpu.dynamic_rotate %5 by %c3_i32 dim 0 : vector<8x256xf32>, i32 -> vector<8x256xf32>
    %23 = vector.extract_strided_slice %7 {offsets = [0, 3], sizes = [8, 1], strides = [1, 1]} : vector<8x8xf32> to vector<8x1xf32>
    %24 = vector.broadcast %23 : vector<8x1xf32> to vector<8x256xf32>
    %25 = arith.mulf %24, %22 : vector<8x256xf32>
    %26 = arith.addf %21, %25 : vector<8x256xf32>
    %c5_i32 = arith.constant 5 : i32
    %27 = tpu.dynamic_rotate %5 by %c5_i32 dim 0 : vector<8x256xf32>, i32 -> vector<8x256xf32>
    %28 = vector.extract_strided_slice %7 {offsets = [0, 5], sizes = [8, 1], strides = [1, 1]} : vector<8x8xf32> to vector<8x1xf32>
    %29 = vector.broadcast %28 : vector<8x1xf32> to vector<8x256xf32>
    %30 = arith.mulf %29, %27 : vector<8x256xf32>
    %31 = arith.addf %26, %30 : vector<8x256xf32>
    %c6_i32 = arith.constant 6 : i32
    %32 = tpu.dynamic_rotate %5 by %c6_i32 dim 0 : vector<8x256xf32>, i32 -> vector<8x256xf32>
    %33 = vector.extract_strided_slice %7 {offsets = [0, 6], sizes = [8, 1], strides = [1, 1]} : vector<8x8xf32> to vector<8x1xf32>
    %34 = vector.broadcast %33 : vector<8x1xf32> to vector<8x256xf32>
    %35 = arith.mulf %34, %32 : vector<8x256xf32>
    %36 = arith.addf %31, %35 : vector<8x256xf32>
    %c7_i32 = arith.constant 7 : i32
    %37 = tpu.dynamic_rotate %5 by %c7_i32 dim 0 : vector<8x256xf32>, i32 -> vector<8x256xf32>
    %38 = vector.extract_strided_slice %7 {offsets = [0, 7], sizes = [8, 1], strides = [1, 1]} : vector<8x8xf32> to vector<8x1xf32>
    %39 = vector.broadcast %38 : vector<8x1xf32> to vector<8x256xf32>
    %40 = arith.mulf %39, %37 : vector<8x256xf32>
    %41 = arith.addf %36, %40 : vector<8x256xf32>
    %c1 = arith.constant 1 : index
    %c0_7 = arith.constant 0 : index
    %c0_8 = arith.constant 0 : index
    %42 = vector.load %arg2[%c1, %c0_7, %c0_8] : memref<9x8x256xf32, #tpu.memory_space<vmem>>, vector<1x8x256xf32>
    %43 = vector.shape_cast %42 : vector<1x8x256xf32> to vector<8x256xf32>
    %c16_i32 = arith.constant 16 : i32
    %44 = tpu.dynamic_rotate %0 by %c16_i32 dim 1 : vector<8x256xf32>, i32 -> vector<8x256xf32>
    %45 = arith.mulf %43, %44 : vector<8x256xf32>
    %c1_9 = arith.constant 1 : index
    %c0_10 = arith.constant 0 : index
    %c0_11 = arith.constant 0 : index
    %46 = vector.load %arg3[%c1_9, %c0_10, %c0_11] : memref<9x8x8xf32, #tpu.memory_space<vmem>>, vector<1x8x8xf32>
    %47 = vector.shape_cast %46 : vector<1x8x8xf32> to vector<8x8xf32>
    %48 = vector.extract_strided_slice %47 {offsets = [0, 0], sizes = [8, 1], strides = [1, 1]} : vector<8x8xf32> to vector<8x1xf32>
    %49 = vector.broadcast %48 : vector<8x1xf32> to vector<8x256xf32>
    %50 = arith.mulf %49, %45 : vector<8x256xf32>
    %51 = arith.addf %41, %50 : vector<8x256xf32>
    %c1_i32_12 = arith.constant 1 : i32
    %52 = tpu.dynamic_rotate %45 by %c1_i32_12 dim 0 : vector<8x256xf32>, i32 -> vector<8x256xf32>
    %53 = vector.extract_strided_slice %47 {offsets = [0, 1], sizes = [8, 1], strides = [1, 1]} : vector<8x8xf32> to vector<8x1xf32>
    %54 = vector.broadcast %53 : vector<8x1xf32> to vector<8x256xf32>
    %55 = arith.mulf %54, %52 : vector<8x256xf32>
    %56 = arith.addf %51, %55 : vector<8x256xf32>
    %c2_i32_13 = arith.constant 2 : i32
    %57 = tpu.dynamic_rotate %45 by %c2_i32_13 dim 0 : vector<8x256xf32>, i32 -> vector<8x256xf32>
    %58 = vector.extract_strided_slice %47 {offsets = [0, 2], sizes = [8, 1], strides = [1, 1]} : vector<8x8xf32> to vector<8x1xf32>
    %59 = vector.broadcast %58 : vector<8x1xf32> to vector<8x256xf32>
    %60 = arith.mulf %59, %57 : vector<8x256xf32>
    %61 = arith.addf %56, %60 : vector<8x256xf32>
    %c3_i32_14 = arith.constant 3 : i32
    %62 = tpu.dynamic_rotate %45 by %c3_i32_14 dim 0 : vector<8x256xf32>, i32 -> vector<8x256xf32>
    %63 = vector.extract_strided_slice %47 {offsets = [0, 3], sizes = [8, 1], strides = [1, 1]} : vector<8x8xf32> to vector<8x1xf32>
    %64 = vector.broadcast %63 : vector<8x1xf32> to vector<8x256xf32>
    %65 = arith.mulf %64, %62 : vector<8x256xf32>
    %66 = arith.addf %61, %65 : vector<8x256xf32>
    %c5_i32_15 = arith.constant 5 : i32
    %67 = tpu.dynamic_rotate %45 by %c5_i32_15 dim 0 : vector<8x256xf32>, i32 -> vector<8x256xf32>
    %68 = vector.extract_strided_slice %47 {offsets = [0, 5], sizes = [8, 1], strides = [1, 1]} : vector<8x8xf32> to vector<8x1xf32>
    %69 = vector.broadcast %68 : vector<8x1xf32> to vector<8x256xf32>
    %70 = arith.mulf %69, %67 : vector<8x256xf32>
    %71 = arith.addf %66, %70 : vector<8x256xf32>
    %c6_i32_16 = arith.constant 6 : i32
    %72 = tpu.dynamic_rotate %45 by %c6_i32_16 dim 0 : vector<8x256xf32>, i32 -> vector<8x256xf32>
    %73 = vector.extract_strided_slice %47 {offsets = [0, 6], sizes = [8, 1], strides = [1, 1]} : vector<8x8xf32> to vector<8x1xf32>
    %74 = vector.broadcast %73 : vector<8x1xf32> to vector<8x256xf32>
    %75 = arith.mulf %74, %72 : vector<8x256xf32>
    %76 = arith.addf %71, %75 : vector<8x256xf32>
    %c7_i32_17 = arith.constant 7 : i32
    %77 = tpu.dynamic_rotate %45 by %c7_i32_17 dim 0 : vector<8x256xf32>, i32 -> vector<8x256xf32>
    %78 = vector.extract_strided_slice %47 {offsets = [0, 7], sizes = [8, 1], strides = [1, 1]} : vector<8x8xf32> to vector<8x1xf32>
    %79 = vector.broadcast %78 : vector<8x1xf32> to vector<8x256xf32>
    %80 = arith.mulf %79, %77 : vector<8x256xf32>
    %81 = arith.addf %76, %80 : vector<8x256xf32>
    %c2 = arith.constant 2 : index
    %c0_18 = arith.constant 0 : index
    %c0_19 = arith.constant 0 : index
    %82 = vector.load %arg2[%c2, %c0_18, %c0_19] : memref<9x8x256xf32, #tpu.memory_space<vmem>>, vector<1x8x256xf32>
    %83 = vector.shape_cast %82 : vector<1x8x256xf32> to vector<8x256xf32>
    %c15_i32 = arith.constant 15 : i32
    %84 = tpu.dynamic_rotate %0 by %c15_i32 dim 1 : vector<8x256xf32>, i32 -> vector<8x256xf32>
    %85 = arith.mulf %83, %84 : vector<8x256xf32>
    %c2_20 = arith.constant 2 : index
    %c0_21 = arith.constant 0 : index
    %c0_22 = arith.constant 0 : index
    %86 = vector.load %arg3[%c2_20, %c0_21, %c0_22] : memref<9x8x8xf32, #tpu.memory_space<vmem>>, vector<1x8x8xf32>
    %87 = vector.shape_cast %86 : vector<1x8x8xf32> to vector<8x8xf32>
    %88 = vector.extract_strided_slice %87 {offsets = [0, 0], sizes = [8, 1], strides = [1, 1]} : vector<8x8xf32> to vector<8x1xf32>
    %89 = vector.broadcast %88 : vector<8x1xf32> to vector<8x256xf32>
    %90 = arith.mulf %89, %85 : vector<8x256xf32>
    %91 = arith.addf %81, %90 : vector<8x256xf32>
    %c1_i32_23 = arith.constant 1 : i32
    %92 = tpu.dynamic_rotate %85 by %c1_i32_23 dim 0 : vector<8x256xf32>, i32 -> vector<8x256xf32>
    %93 = vector.extract_strided_slice %87 {offsets = [0, 1], sizes = [8, 1], strides = [1, 1]} : vector<8x8xf32> to vector<8x1xf32>
    %94 = vector.broadcast %93 : vector<8x1xf32> to vector<8x256xf32>
    %95 = arith.mulf %94, %92 : vector<8x256xf32>
    %96 = arith.addf %91, %95 : vector<8x256xf32>
    %c2_i32_24 = arith.constant 2 : i32
    %97 = tpu.dynamic_rotate %85 by %c2_i32_24 dim 0 : vector<8x256xf32>, i32 -> vector<8x256xf32>
    %98 = vector.extract_strided_slice %87 {offsets = [0, 2], sizes = [8, 1], strides = [1, 1]} : vector<8x8xf32> to vector<8x1xf32>
    %99 = vector.broadcast %98 : vector<8x1xf32> to vector<8x256xf32>
    %100 = arith.mulf %99, %97 : vector<8x256xf32>
    %101 = arith.addf %96, %100 : vector<8x256xf32>
    %c3_i32_25 = arith.constant 3 : i32
    %102 = tpu.dynamic_rotate %85 by %c3_i32_25 dim 0 : vector<8x256xf32>, i32 -> vector<8x256xf32>
    %103 = vector.extract_strided_slice %87 {offsets = [0, 3], sizes = [8, 1], strides = [1, 1]} : vector<8x8xf32> to vector<8x1xf32>
    %104 = vector.broadcast %103 : vector<8x1xf32> to vector<8x256xf32>
    %105 = arith.mulf %104, %102 : vector<8x256xf32>
    %106 = arith.addf %101, %105 : vector<8x256xf32>
    %c5_i32_26 = arith.constant 5 : i32
    %107 = tpu.dynamic_rotate %85 by %c5_i32_26 dim 0 : vector<8x256xf32>, i32 -> vector<8x256xf32>
    %108 = vector.extract_strided_slice %87 {offsets = [0, 5], sizes = [8, 1], strides = [1, 1]} : vector<8x8xf32> to vector<8x1xf32>
    %109 = vector.broadcast %108 : vector<8x1xf32> to vector<8x256xf32>
    %110 = arith.mulf %109, %107 : vector<8x256xf32>
    %111 = arith.addf %106, %110 : vector<8x256xf32>
    %c6_i32_27 = arith.constant 6 : i32
    %112 = tpu.dynamic_rotate %85 by %c6_i32_27 dim 0 : vector<8x256xf32>, i32 -> vector<8x256xf32>
    %113 = vector.extract_strided_slice %87 {offsets = [0, 6], sizes = [8, 1], strides = [1, 1]} : vector<8x8xf32> to vector<8x1xf32>
    %114 = vector.broadcast %113 : vector<8x1xf32> to vector<8x256xf32>
    %115 = arith.mulf %114, %112 : vector<8x256xf32>
    %116 = arith.addf %111, %115 : vector<8x256xf32>
    %c7_i32_28 = arith.constant 7 : i32
    %117 = tpu.dynamic_rotate %85 by %c7_i32_28 dim 0 : vector<8x256xf32>, i32 -> vector<8x256xf32>
    %118 = vector.extract_strided_slice %87 {offsets = [0, 7], sizes = [8, 1], strides = [1, 1]} : vector<8x8xf32> to vector<8x1xf32>
    %119 = vector.broadcast %118 : vector<8x1xf32> to vector<8x256xf32>
    %120 = arith.mulf %119, %117 : vector<8x256xf32>
    %121 = arith.addf %116, %120 : vector<8x256xf32>
    %c3 = arith.constant 3 : index
    %c0_29 = arith.constant 0 : index
    %c0_30 = arith.constant 0 : index
    %122 = vector.load %arg2[%c3, %c0_29, %c0_30] : memref<9x8x256xf32, #tpu.memory_space<vmem>>, vector<1x8x256xf32>
    %123 = vector.shape_cast %122 : vector<1x8x256xf32> to vector<8x256xf32>
    %c1_i32_31 = arith.constant 1 : i32
    %124 = tpu.dynamic_rotate %0 by %c1_i32_31 dim 1 : vector<8x256xf32>, i32 -> vector<8x256xf32>
    %125 = arith.mulf %123, %124 : vector<8x256xf32>
    %c3_32 = arith.constant 3 : index
    %c0_33 = arith.constant 0 : index
    %c0_34 = arith.constant 0 : index
    %126 = vector.load %arg3[%c3_32, %c0_33, %c0_34] : memref<9x8x8xf32, #tpu.memory_space<vmem>>, vector<1x8x8xf32>
    %127 = vector.shape_cast %126 : vector<1x8x8xf32> to vector<8x8xf32>
    %128 = vector.extract_strided_slice %127 {offsets = [0, 0], sizes = [8, 1], strides = [1, 1]} : vector<8x8xf32> to vector<8x1xf32>
    %129 = vector.broadcast %128 : vector<8x1xf32> to vector<8x256xf32>
    %130 = arith.mulf %129, %125 : vector<8x256xf32>
    %131 = arith.addf %121, %130 : vector<8x256xf32>
    %c1_i32_35 = arith.constant 1 : i32
    %132 = tpu.dynamic_rotate %125 by %c1_i32_35 dim 0 : vector<8x256xf32>, i32 -> vector<8x256xf32>
    %133 = vector.extract_strided_slice %127 {offsets = [0, 1], sizes = [8, 1], strides = [1, 1]} : vector<8x8xf32> to vector<8x1xf32>
    %134 = vector.broadcast %133 : vector<8x1xf32> to vector<8x256xf32>
    %135 = arith.mulf %134, %132 : vector<8x256xf32>
    %136 = arith.addf %131, %135 : vector<8x256xf32>
    %c2_i32_36 = arith.constant 2 : i32
    %137 = tpu.dynamic_rotate %125 by %c2_i32_36 dim 0 : vector<8x256xf32>, i32 -> vector<8x256xf32>
    %138 = vector.extract_strided_slice %127 {offsets = [0, 2], sizes = [8, 1], strides = [1, 1]} : vector<8x8xf32> to vector<8x1xf32>
    %139 = vector.broadcast %138 : vector<8x1xf32> to vector<8x256xf32>
    %140 = arith.mulf %139, %137 : vector<8x256xf32>
    %141 = arith.addf %136, %140 : vector<8x256xf32>
    %c3_i32_37 = arith.constant 3 : i32
    %142 = tpu.dynamic_rotate %125 by %c3_i32_37 dim 0 : vector<8x256xf32>, i32 -> vector<8x256xf32>
    %143 = vector.extract_strided_slice %127 {offsets = [0, 3], sizes = [8, 1], strides = [1, 1]} : vector<8x8xf32> to vector<8x1xf32>
    %144 = vector.broadcast %143 : vector<8x1xf32> to vector<8x256xf32>
    %145 = arith.mulf %144, %142 : vector<8x256xf32>
    %146 = arith.addf %141, %145 : vector<8x256xf32>
    %c5_i32_38 = arith.constant 5 : i32
    %147 = tpu.dynamic_rotate %125 by %c5_i32_38 dim 0 : vector<8x256xf32>, i32 -> vector<8x256xf32>
    %148 = vector.extract_strided_slice %127 {offsets = [0, 5], sizes = [8, 1], strides = [1, 1]} : vector<8x8xf32> to vector<8x1xf32>
    %149 = vector.broadcast %148 : vector<8x1xf32> to vector<8x256xf32>
    %150 = arith.mulf %149, %147 : vector<8x256xf32>
    %151 = arith.addf %146, %150 : vector<8x256xf32>
    %c6_i32_39 = arith.constant 6 : i32
    %152 = tpu.dynamic_rotate %125 by %c6_i32_39 dim 0 : vector<8x256xf32>, i32 -> vector<8x256xf32>
    %153 = vector.extract_strided_slice %127 {offsets = [0, 6], sizes = [8, 1], strides = [1, 1]} : vector<8x8xf32> to vector<8x1xf32>
    %154 = vector.broadcast %153 : vector<8x1xf32> to vector<8x256xf32>
    %155 = arith.mulf %154, %152 : vector<8x256xf32>
    %156 = arith.addf %151, %155 : vector<8x256xf32>
    %c7_i32_40 = arith.constant 7 : i32
    %157 = tpu.dynamic_rotate %125 by %c7_i32_40 dim 0 : vector<8x256xf32>, i32 -> vector<8x256xf32>
    %158 = vector.extract_strided_slice %127 {offsets = [0, 7], sizes = [8, 1], strides = [1, 1]} : vector<8x8xf32> to vector<8x1xf32>
    %159 = vector.broadcast %158 : vector<8x1xf32> to vector<8x256xf32>
    %160 = arith.mulf %159, %157 : vector<8x256xf32>
    %161 = arith.addf %156, %160 : vector<8x256xf32>
    %c4 = arith.constant 4 : index
    %c0_41 = arith.constant 0 : index
    %c0_42 = arith.constant 0 : index
    %162 = vector.load %arg3[%c4, %c0_41, %c0_42] : memref<9x8x8xf32, #tpu.memory_space<vmem>>, vector<1x8x8xf32>
    %163 = vector.shape_cast %162 : vector<1x8x8xf32> to vector<8x8xf32>
    %164 = vector.extract_strided_slice %163 {offsets = [0, 0], sizes = [8, 1], strides = [1, 1]} : vector<8x8xf32> to vector<8x1xf32>
    %165 = vector.broadcast %164 : vector<8x1xf32> to vector<8x256xf32>
    %166 = arith.mulf %165, %0 : vector<8x256xf32>
    %167 = arith.addf %161, %166 : vector<8x256xf32>
    %c1_i32_43 = arith.constant 1 : i32
    %168 = tpu.dynamic_rotate %0 by %c1_i32_43 dim 0 : vector<8x256xf32>, i32 -> vector<8x256xf32>
    %169 = vector.extract_strided_slice %163 {offsets = [0, 1], sizes = [8, 1], strides = [1, 1]} : vector<8x8xf32> to vector<8x1xf32>
    %170 = vector.broadcast %169 : vector<8x1xf32> to vector<8x256xf32>
    %171 = arith.mulf %170, %168 : vector<8x256xf32>
    %172 = arith.addf %167, %171 : vector<8x256xf32>
    %c2_i32_44 = arith.constant 2 : i32
    %173 = tpu.dynamic_rotate %0 by %c2_i32_44 dim 0 : vector<8x256xf32>, i32 -> vector<8x256xf32>
    %174 = vector.extract_strided_slice %163 {offsets = [0, 2], sizes = [8, 1], strides = [1, 1]} : vector<8x8xf32> to vector<8x1xf32>
    %175 = vector.broadcast %174 : vector<8x1xf32> to vector<8x256xf32>
    %176 = arith.mulf %175, %173 : vector<8x256xf32>
    %177 = arith.addf %172, %176 : vector<8x256xf32>
    %c3_i32_45 = arith.constant 3 : i32
    %178 = tpu.dynamic_rotate %0 by %c3_i32_45 dim 0 : vector<8x256xf32>, i32 -> vector<8x256xf32>
    %179 = vector.extract_strided_slice %163 {offsets = [0, 3], sizes = [8, 1], strides = [1, 1]} : vector<8x8xf32> to vector<8x1xf32>
    %180 = vector.broadcast %179 : vector<8x1xf32> to vector<8x256xf32>
    %181 = arith.mulf %180, %178 : vector<8x256xf32>
    %182 = arith.addf %177, %181 : vector<8x256xf32>
    %c5_i32_46 = arith.constant 5 : i32
    %183 = tpu.dynamic_rotate %0 by %c5_i32_46 dim 0 : vector<8x256xf32>, i32 -> vector<8x256xf32>
    %184 = vector.extract_strided_slice %163 {offsets = [0, 5], sizes = [8, 1], strides = [1, 1]} : vector<8x8xf32> to vector<8x1xf32>
    %185 = vector.broadcast %184 : vector<8x1xf32> to vector<8x256xf32>
    %186 = arith.mulf %185, %183 : vector<8x256xf32>
    %187 = arith.addf %182, %186 : vector<8x256xf32>
    %c6_i32_47 = arith.constant 6 : i32
    %188 = tpu.dynamic_rotate %0 by %c6_i32_47 dim 0 : vector<8x256xf32>, i32 -> vector<8x256xf32>
    %189 = vector.extract_strided_slice %163 {offsets = [0, 6], sizes = [8, 1], strides = [1, 1]} : vector<8x8xf32> to vector<8x1xf32>
    %190 = vector.broadcast %189 : vector<8x1xf32> to vector<8x256xf32>
    %191 = arith.mulf %190, %188 : vector<8x256xf32>
    %192 = arith.addf %187, %191 : vector<8x256xf32>
    %c7_i32_48 = arith.constant 7 : i32
    %193 = tpu.dynamic_rotate %0 by %c7_i32_48 dim 0 : vector<8x256xf32>, i32 -> vector<8x256xf32>
    %194 = vector.extract_strided_slice %163 {offsets = [0, 7], sizes = [8, 1], strides = [1, 1]} : vector<8x8xf32> to vector<8x1xf32>
    %195 = vector.broadcast %194 : vector<8x1xf32> to vector<8x256xf32>
    %196 = arith.mulf %195, %193 : vector<8x256xf32>
    %197 = arith.addf %192, %196 : vector<8x256xf32>
    %c5 = arith.constant 5 : index
    %c0_49 = arith.constant 0 : index
    %c0_50 = arith.constant 0 : index
    %198 = vector.load %arg2[%c5, %c0_49, %c0_50] : memref<9x8x256xf32, #tpu.memory_space<vmem>>, vector<1x8x256xf32>
    %199 = vector.shape_cast %198 : vector<1x8x256xf32> to vector<8x256xf32>
    %c255_i32 = arith.constant 255 : i32
    %200 = tpu.dynamic_rotate %0 by %c255_i32 dim 1 : vector<8x256xf32>, i32 -> vector<8x256xf32>
    %201 = arith.mulf %199, %200 : vector<8x256xf32>
    %c5_51 = arith.constant 5 : index
    %c0_52 = arith.constant 0 : index
    %c0_53 = arith.constant 0 : index
    %202 = vector.load %arg3[%c5_51, %c0_52, %c0_53] : memref<9x8x8xf32, #tpu.memory_space<vmem>>, vector<1x8x8xf32>
    %203 = vector.shape_cast %202 : vector<1x8x8xf32> to vector<8x8xf32>
    %204 = vector.extract_strided_slice %203 {offsets = [0, 0], sizes = [8, 1], strides = [1, 1]} : vector<8x8xf32> to vector<8x1xf32>
    %205 = vector.broadcast %204 : vector<8x1xf32> to vector<8x256xf32>
    %206 = arith.mulf %205, %201 : vector<8x256xf32>
    %207 = arith.addf %197, %206 : vector<8x256xf32>
    %c1_i32_54 = arith.constant 1 : i32
    %208 = tpu.dynamic_rotate %201 by %c1_i32_54 dim 0 : vector<8x256xf32>, i32 -> vector<8x256xf32>
    %209 = vector.extract_strided_slice %203 {offsets = [0, 1], sizes = [8, 1], strides = [1, 1]} : vector<8x8xf32> to vector<8x1xf32>
    %210 = vector.broadcast %209 : vector<8x1xf32> to vector<8x256xf32>
    %211 = arith.mulf %210, %208 : vector<8x256xf32>
    %212 = arith.addf %207, %211 : vector<8x256xf32>
    %c2_i32_55 = arith.constant 2 : i32
    %213 = tpu.dynamic_rotate %201 by %c2_i32_55 dim 0 : vector<8x256xf32>, i32 -> vector<8x256xf32>
    %214 = vector.extract_strided_slice %203 {offsets = [0, 2], sizes = [8, 1], strides = [1, 1]} : vector<8x8xf32> to vector<8x1xf32>
    %215 = vector.broadcast %214 : vector<8x1xf32> to vector<8x256xf32>
    %216 = arith.mulf %215, %213 : vector<8x256xf32>
    %217 = arith.addf %212, %216 : vector<8x256xf32>
    %c3_i32_56 = arith.constant 3 : i32
    %218 = tpu.dynamic_rotate %201 by %c3_i32_56 dim 0 : vector<8x256xf32>, i32 -> vector<8x256xf32>
    %219 = vector.extract_strided_slice %203 {offsets = [0, 3], sizes = [8, 1], strides = [1, 1]} : vector<8x8xf32> to vector<8x1xf32>
    %220 = vector.broadcast %219 : vector<8x1xf32> to vector<8x256xf32>
    %221 = arith.mulf %220, %218 : vector<8x256xf32>
    %222 = arith.addf %217, %221 : vector<8x256xf32>
    %c5_i32_57 = arith.constant 5 : i32
    %223 = tpu.dynamic_rotate %201 by %c5_i32_57 dim 0 : vector<8x256xf32>, i32 -> vector<8x256xf32>
    %224 = vector.extract_strided_slice %203 {offsets = [0, 5], sizes = [8, 1], strides = [1, 1]} : vector<8x8xf32> to vector<8x1xf32>
    %225 = vector.broadcast %224 : vector<8x1xf32> to vector<8x256xf32>
    %226 = arith.mulf %225, %223 : vector<8x256xf32>
    %227 = arith.addf %222, %226 : vector<8x256xf32>
    %c6_i32_58 = arith.constant 6 : i32
    %228 = tpu.dynamic_rotate %201 by %c6_i32_58 dim 0 : vector<8x256xf32>, i32 -> vector<8x256xf32>
    %229 = vector.extract_strided_slice %203 {offsets = [0, 6], sizes = [8, 1], strides = [1, 1]} : vector<8x8xf32> to vector<8x1xf32>
    %230 = vector.broadcast %229 : vector<8x1xf32> to vector<8x256xf32>
    %231 = arith.mulf %230, %228 : vector<8x256xf32>
    %232 = arith.addf %227, %231 : vector<8x256xf32>
    %c7_i32_59 = arith.constant 7 : i32
    %233 = tpu.dynamic_rotate %201 by %c7_i32_59 dim 0 : vector<8x256xf32>, i32 -> vector<8x256xf32>
    %234 = vector.extract_strided_slice %203 {offsets = [0, 7], sizes = [8, 1], strides = [1, 1]} : vector<8x8xf32> to vector<8x1xf32>
    %235 = vector.broadcast %234 : vector<8x1xf32> to vector<8x256xf32>
    %236 = arith.mulf %235, %233 : vector<8x256xf32>
    %237 = arith.addf %232, %236 : vector<8x256xf32>
    %c6 = arith.constant 6 : index
    %c0_60 = arith.constant 0 : index
    %c0_61 = arith.constant 0 : index
    %238 = vector.load %arg2[%c6, %c0_60, %c0_61] : memref<9x8x256xf32, #tpu.memory_space<vmem>>, vector<1x8x256xf32>
    %239 = vector.shape_cast %238 : vector<1x8x256xf32> to vector<8x256xf32>
    %c241_i32 = arith.constant 241 : i32
    %240 = tpu.dynamic_rotate %0 by %c241_i32 dim 1 : vector<8x256xf32>, i32 -> vector<8x256xf32>
    %241 = arith.mulf %239, %240 : vector<8x256xf32>
    %c6_62 = arith.constant 6 : index
    %c0_63 = arith.constant 0 : index
    %c0_64 = arith.constant 0 : index
    %242 = vector.load %arg3[%c6_62, %c0_63, %c0_64] : memref<9x8x8xf32, #tpu.memory_space<vmem>>, vector<1x8x8xf32>
    %243 = vector.shape_cast %242 : vector<1x8x8xf32> to vector<8x8xf32>
    %244 = vector.extract_strided_slice %243 {offsets = [0, 0], sizes = [8, 1], strides = [1, 1]} : vector<8x8xf32> to vector<8x1xf32>
    %245 = vector.broadcast %244 : vector<8x1xf32> to vector<8x256xf32>
    %246 = arith.mulf %245, %241 : vector<8x256xf32>
    %247 = arith.addf %237, %246 : vector<8x256xf32>
    %c1_i32_65 = arith.constant 1 : i32
    %248 = tpu.dynamic_rotate %241 by %c1_i32_65 dim 0 : vector<8x256xf32>, i32 -> vector<8x256xf32>
    %249 = vector.extract_strided_slice %243 {offsets = [0, 1], sizes = [8, 1], strides = [1, 1]} : vector<8x8xf32> to vector<8x1xf32>
    %250 = vector.broadcast %249 : vector<8x1xf32> to vector<8x256xf32>
    %251 = arith.mulf %250, %248 : vector<8x256xf32>
    %252 = arith.addf %247, %251 : vector<8x256xf32>
    %c2_i32_66 = arith.constant 2 : i32
    %253 = tpu.dynamic_rotate %241 by %c2_i32_66 dim 0 : vector<8x256xf32>, i32 -> vector<8x256xf32>
    %254 = vector.extract_strided_slice %243 {offsets = [0, 2], sizes = [8, 1], strides = [1, 1]} : vector<8x8xf32> to vector<8x1xf32>
    %255 = vector.broadcast %254 : vector<8x1xf32> to vector<8x256xf32>
    %256 = arith.mulf %255, %253 : vector<8x256xf32>
    %257 = arith.addf %252, %256 : vector<8x256xf32>
    %c3_i32_67 = arith.constant 3 : i32
    %258 = tpu.dynamic_rotate %241 by %c3_i32_67 dim 0 : vector<8x256xf32>, i32 -> vector<8x256xf32>
    %259 = vector.extract_strided_slice %243 {offsets = [0, 3], sizes = [8, 1], strides = [1, 1]} : vector<8x8xf32> to vector<8x1xf32>
    %260 = vector.broadcast %259 : vector<8x1xf32> to vector<8x256xf32>
    %261 = arith.mulf %260, %258 : vector<8x256xf32>
    %262 = arith.addf %257, %261 : vector<8x256xf32>
    %c5_i32_68 = arith.constant 5 : i32
    %263 = tpu.dynamic_rotate %241 by %c5_i32_68 dim 0 : vector<8x256xf32>, i32 -> vector<8x256xf32>
    %264 = vector.extract_strided_slice %243 {offsets = [0, 5], sizes = [8, 1], strides = [1, 1]} : vector<8x8xf32> to vector<8x1xf32>
    %265 = vector.broadcast %264 : vector<8x1xf32> to vector<8x256xf32>
    %266 = arith.mulf %265, %263 : vector<8x256xf32>
    %267 = arith.addf %262, %266 : vector<8x256xf32>
    %c6_i32_69 = arith.constant 6 : i32
    %268 = tpu.dynamic_rotate %241 by %c6_i32_69 dim 0 : vector<8x256xf32>, i32 -> vector<8x256xf32>
    %269 = vector.extract_strided_slice %243 {offsets = [0, 6], sizes = [8, 1], strides = [1, 1]} : vector<8x8xf32> to vector<8x1xf32>
    %270 = vector.broadcast %269 : vector<8x1xf32> to vector<8x256xf32>
    %271 = arith.mulf %270, %268 : vector<8x256xf32>
    %272 = arith.addf %267, %271 : vector<8x256xf32>
    %c7_i32_70 = arith.constant 7 : i32
    %273 = tpu.dynamic_rotate %241 by %c7_i32_70 dim 0 : vector<8x256xf32>, i32 -> vector<8x256xf32>
    %274 = vector.extract_strided_slice %243 {offsets = [0, 7], sizes = [8, 1], strides = [1, 1]} : vector<8x8xf32> to vector<8x1xf32>
    %275 = vector.broadcast %274 : vector<8x1xf32> to vector<8x256xf32>
    %276 = arith.mulf %275, %273 : vector<8x256xf32>
    %277 = arith.addf %272, %276 : vector<8x256xf32>
    %c7 = arith.constant 7 : index
    %c0_71 = arith.constant 0 : index
    %c0_72 = arith.constant 0 : index
    %278 = vector.load %arg2[%c7, %c0_71, %c0_72] : memref<9x8x256xf32, #tpu.memory_space<vmem>>, vector<1x8x256xf32>
    %279 = vector.shape_cast %278 : vector<1x8x256xf32> to vector<8x256xf32>
    %c240_i32 = arith.constant 240 : i32
    %280 = tpu.dynamic_rotate %0 by %c240_i32 dim 1 : vector<8x256xf32>, i32 -> vector<8x256xf32>
    %281 = arith.mulf %279, %280 : vector<8x256xf32>
    %c7_73 = arith.constant 7 : index
    %c0_74 = arith.constant 0 : index
    %c0_75 = arith.constant 0 : index
    %282 = vector.load %arg3[%c7_73, %c0_74, %c0_75] : memref<9x8x8xf32, #tpu.memory_space<vmem>>, vector<1x8x8xf32>
    %283 = vector.shape_cast %282 : vector<1x8x8xf32> to vector<8x8xf32>
    %284 = vector.extract_strided_slice %283 {offsets = [0, 0], sizes = [8, 1], strides = [1, 1]} : vector<8x8xf32> to vector<8x1xf32>
    %285 = vector.broadcast %284 : vector<8x1xf32> to vector<8x256xf32>
    %286 = arith.mulf %285, %281 : vector<8x256xf32>
    %287 = arith.addf %277, %286 : vector<8x256xf32>
    %c1_i32_76 = arith.constant 1 : i32
    %288 = tpu.dynamic_rotate %281 by %c1_i32_76 dim 0 : vector<8x256xf32>, i32 -> vector<8x256xf32>
    %289 = vector.extract_strided_slice %283 {offsets = [0, 1], sizes = [8, 1], strides = [1, 1]} : vector<8x8xf32> to vector<8x1xf32>
    %290 = vector.broadcast %289 : vector<8x1xf32> to vector<8x256xf32>
    %291 = arith.mulf %290, %288 : vector<8x256xf32>
    %292 = arith.addf %287, %291 : vector<8x256xf32>
    %c2_i32_77 = arith.constant 2 : i32
    %293 = tpu.dynamic_rotate %281 by %c2_i32_77 dim 0 : vector<8x256xf32>, i32 -> vector<8x256xf32>
    %294 = vector.extract_strided_slice %283 {offsets = [0, 2], sizes = [8, 1], strides = [1, 1]} : vector<8x8xf32> to vector<8x1xf32>
    %295 = vector.broadcast %294 : vector<8x1xf32> to vector<8x256xf32>
    %296 = arith.mulf %295, %293 : vector<8x256xf32>
    %297 = arith.addf %292, %296 : vector<8x256xf32>
    %c3_i32_78 = arith.constant 3 : i32
    %298 = tpu.dynamic_rotate %281 by %c3_i32_78 dim 0 : vector<8x256xf32>, i32 -> vector<8x256xf32>
    %299 = vector.extract_strided_slice %283 {offsets = [0, 3], sizes = [8, 1], strides = [1, 1]} : vector<8x8xf32> to vector<8x1xf32>
    %300 = vector.broadcast %299 : vector<8x1xf32> to vector<8x256xf32>
    %301 = arith.mulf %300, %298 : vector<8x256xf32>
    %302 = arith.addf %297, %301 : vector<8x256xf32>
    %c5_i32_79 = arith.constant 5 : i32
    %303 = tpu.dynamic_rotate %281 by %c5_i32_79 dim 0 : vector<8x256xf32>, i32 -> vector<8x256xf32>
    %304 = vector.extract_strided_slice %283 {offsets = [0, 5], sizes = [8, 1], strides = [1, 1]} : vector<8x8xf32> to vector<8x1xf32>
    %305 = vector.broadcast %304 : vector<8x1xf32> to vector<8x256xf32>
    %306 = arith.mulf %305, %303 : vector<8x256xf32>
    %307 = arith.addf %302, %306 : vector<8x256xf32>
    %c6_i32_80 = arith.constant 6 : i32
    %308 = tpu.dynamic_rotate %281 by %c6_i32_80 dim 0 : vector<8x256xf32>, i32 -> vector<8x256xf32>
    %309 = vector.extract_strided_slice %283 {offsets = [0, 6], sizes = [8, 1], strides = [1, 1]} : vector<8x8xf32> to vector<8x1xf32>
    %310 = vector.broadcast %309 : vector<8x1xf32> to vector<8x256xf32>
    %311 = arith.mulf %310, %308 : vector<8x256xf32>
    %312 = arith.addf %307, %311 : vector<8x256xf32>
    %c7_i32_81 = arith.constant 7 : i32
    %313 = tpu.dynamic_rotate %281 by %c7_i32_81 dim 0 : vector<8x256xf32>, i32 -> vector<8x256xf32>
    %314 = vector.extract_strided_slice %283 {offsets = [0, 7], sizes = [8, 1], strides = [1, 1]} : vector<8x8xf32> to vector<8x1xf32>
    %315 = vector.broadcast %314 : vector<8x1xf32> to vector<8x256xf32>
    %316 = arith.mulf %315, %313 : vector<8x256xf32>
    %317 = arith.addf %312, %316 : vector<8x256xf32>
    %c8 = arith.constant 8 : index
    %c0_82 = arith.constant 0 : index
    %c0_83 = arith.constant 0 : index
    %318 = vector.load %arg2[%c8, %c0_82, %c0_83] : memref<9x8x256xf32, #tpu.memory_space<vmem>>, vector<1x8x256xf32>
    %319 = vector.shape_cast %318 : vector<1x8x256xf32> to vector<8x256xf32>
    %c239_i32 = arith.constant 239 : i32
    %320 = tpu.dynamic_rotate %0 by %c239_i32 dim 1 : vector<8x256xf32>, i32 -> vector<8x256xf32>
    %321 = arith.mulf %319, %320 : vector<8x256xf32>
    %c8_84 = arith.constant 8 : index
    %c0_85 = arith.constant 0 : index
    %c0_86 = arith.constant 0 : index
    %322 = vector.load %arg3[%c8_84, %c0_85, %c0_86] : memref<9x8x8xf32, #tpu.memory_space<vmem>>, vector<1x8x8xf32>
    %323 = vector.shape_cast %322 : vector<1x8x8xf32> to vector<8x8xf32>
    %324 = vector.extract_strided_slice %323 {offsets = [0, 0], sizes = [8, 1], strides = [1, 1]} : vector<8x8xf32> to vector<8x1xf32>
    %325 = vector.broadcast %324 : vector<8x1xf32> to vector<8x256xf32>
    %326 = arith.mulf %325, %321 : vector<8x256xf32>
    %327 = arith.addf %317, %326 : vector<8x256xf32>
    %c1_i32_87 = arith.constant 1 : i32
    %328 = tpu.dynamic_rotate %321 by %c1_i32_87 dim 0 : vector<8x256xf32>, i32 -> vector<8x256xf32>
    %329 = vector.extract_strided_slice %323 {offsets = [0, 1], sizes = [8, 1], strides = [1, 1]} : vector<8x8xf32> to vector<8x1xf32>
    %330 = vector.broadcast %329 : vector<8x1xf32> to vector<8x256xf32>
    %331 = arith.mulf %330, %328 : vector<8x256xf32>
    %332 = arith.addf %327, %331 : vector<8x256xf32>
    %c2_i32_88 = arith.constant 2 : i32
    %333 = tpu.dynamic_rotate %321 by %c2_i32_88 dim 0 : vector<8x256xf32>, i32 -> vector<8x256xf32>
    %334 = vector.extract_strided_slice %323 {offsets = [0, 2], sizes = [8, 1], strides = [1, 1]} : vector<8x8xf32> to vector<8x1xf32>
    %335 = vector.broadcast %334 : vector<8x1xf32> to vector<8x256xf32>
    %336 = arith.mulf %335, %333 : vector<8x256xf32>
    %337 = arith.addf %332, %336 : vector<8x256xf32>
    %c3_i32_89 = arith.constant 3 : i32
    %338 = tpu.dynamic_rotate %321 by %c3_i32_89 dim 0 : vector<8x256xf32>, i32 -> vector<8x256xf32>
    %339 = vector.extract_strided_slice %323 {offsets = [0, 3], sizes = [8, 1], strides = [1, 1]} : vector<8x8xf32> to vector<8x1xf32>
    %340 = vector.broadcast %339 : vector<8x1xf32> to vector<8x256xf32>
    %341 = arith.mulf %340, %338 : vector<8x256xf32>
    %342 = arith.addf %337, %341 : vector<8x256xf32>
    %c5_i32_90 = arith.constant 5 : i32
    %343 = tpu.dynamic_rotate %321 by %c5_i32_90 dim 0 : vector<8x256xf32>, i32 -> vector<8x256xf32>
    %344 = vector.extract_strided_slice %323 {offsets = [0, 5], sizes = [8, 1], strides = [1, 1]} : vector<8x8xf32> to vector<8x1xf32>
    %345 = vector.broadcast %344 : vector<8x1xf32> to vector<8x256xf32>
    %346 = arith.mulf %345, %343 : vector<8x256xf32>
    %347 = arith.addf %342, %346 : vector<8x256xf32>
    %c6_i32_91 = arith.constant 6 : i32
    %348 = tpu.dynamic_rotate %321 by %c6_i32_91 dim 0 : vector<8x256xf32>, i32 -> vector<8x256xf32>
    %349 = vector.extract_strided_slice %323 {offsets = [0, 6], sizes = [8, 1], strides = [1, 1]} : vector<8x8xf32> to vector<8x1xf32>
    %350 = vector.broadcast %349 : vector<8x1xf32> to vector<8x256xf32>
    %351 = arith.mulf %350, %348 : vector<8x256xf32>
    %352 = arith.addf %347, %351 : vector<8x256xf32>
    %c7_i32_92 = arith.constant 7 : i32
    %353 = tpu.dynamic_rotate %321 by %c7_i32_92 dim 0 : vector<8x256xf32>, i32 -> vector<8x256xf32>
    %354 = vector.extract_strided_slice %323 {offsets = [0, 7], sizes = [8, 1], strides = [1, 1]} : vector<8x8xf32> to vector<8x1xf32>
    %355 = vector.broadcast %354 : vector<8x1xf32> to vector<8x256xf32>
    %356 = arith.mulf %355, %353 : vector<8x256xf32>
    %357 = arith.addf %352, %356 : vector<8x256xf32>
    %cst_93 = arith.constant dense<0.000000e+00> : vector<8xf32>
    %358 = vector.multi_reduction <add>, %357, %cst_93 [1] : vector<8x256xf32> to vector<8xf32>
    %359 = vector.shape_cast %358 : vector<8xf32> to vector<8x1xf32>
    %360 = arith.mulf %357, %357 : vector<8x256xf32>
    %cst_94 = arith.constant dense<0.000000e+00> : vector<8xf32>
    %361 = vector.multi_reduction <add>, %360, %cst_94 [1] : vector<8x256xf32> to vector<8xf32>
    %362 = vector.shape_cast %361 : vector<8xf32> to vector<8x1xf32>
    %c4_i32 = arith.constant 4 : i32
    %363 = tpu.dynamic_rotate %359 by %c4_i32 dim 0 : vector<8x1xf32>, i32 -> vector<8x1xf32>
    %364 = arith.addf %359, %363 : vector<8x1xf32>
    %c4_i32_95 = arith.constant 4 : i32
    %365 = tpu.dynamic_rotate %362 by %c4_i32_95 dim 0 : vector<8x1xf32>, i32 -> vector<8x1xf32>
    %366 = arith.addf %362, %365 : vector<8x1xf32>
    %cst_96 = arith.constant 0.001953125 : f32
    %367 = vector.broadcast %cst_96 : f32 to vector<8x1xf32>
    %368 = arith.mulf %364, %367 : vector<8x1xf32>
    %cst_97 = arith.constant 0.001953125 : f32
    %369 = vector.broadcast %cst_97 : f32 to vector<8x1xf32>
    %370 = arith.mulf %366, %369 : vector<8x1xf32>
    %371 = arith.mulf %368, %368 : vector<8x1xf32>
    %372 = arith.subf %370, %371 : vector<8x1xf32>
    %c0_98 = arith.constant 0 : index
    %c0_99 = arith.constant 0 : index
    %373 = vector.load %arg5[%c0_98, %c0_99] : memref<8x1xf32, #tpu.memory_space<vmem>>, vector<8x1xf32>
    %cst_100 = arith.constant 9.99999974E-6 : f32
    %374 = vector.broadcast %cst_100 : f32 to vector<8x1xf32>
    %375 = arith.addf %372, %374 : vector<8x1xf32>
    %376 = math.rsqrt %375 : vector<8x1xf32>
    %377 = arith.mulf %373, %376 : vector<8x1xf32>
    %c0_101 = arith.constant 0 : index
    %c0_102 = arith.constant 0 : index
    %378 = vector.load %arg6[%c0_101, %c0_102] : memref<8x1xf32, #tpu.memory_space<vmem>>, vector<8x1xf32>
    %379 = arith.mulf %368, %377 : vector<8x1xf32>
    %380 = arith.subf %378, %379 : vector<8x1xf32>
    %381 = vector.broadcast %377 : vector<8x1xf32> to vector<8x256xf32>
    %382 = arith.mulf %357, %381 : vector<8x256xf32>
    %383 = vector.broadcast %380 : vector<8x1xf32> to vector<8x256xf32>
    %384 = arith.addf %382, %383 : vector<8x256xf32>
    %cst_103 = arith.constant 0.000000e+00 : f32
    %385 = vector.broadcast %cst_103 : f32 to vector<8x256xf32>
    %386 = arith.maximumf %384, %385 : vector<8x256xf32>
    %cst_104 = arith.constant 0.000000e+00 : f32
    %387 = vector.broadcast %cst_104 : f32 to vector<8x256xf32>
    %c0_105 = arith.constant 0 : index
    %c0_106 = arith.constant 0 : index
    %c0_107 = arith.constant 0 : index
    %388 = vector.load %arg2[%c0_105, %c0_106, %c0_107] : memref<9x8x256xf32, #tpu.memory_space<vmem>>, vector<1x8x256xf32>
    %389 = vector.shape_cast %388 : vector<1x8x256xf32> to vector<8x256xf32>
    %c17_i32_108 = arith.constant 17 : i32
    %390 = tpu.dynamic_rotate %386 by %c17_i32_108 dim 1 : vector<8x256xf32>, i32 -> vector<8x256xf32>
    %391 = arith.mulf %389, %390 : vector<8x256xf32>
    %c0_109 = arith.constant 0 : index
    %c0_110 = arith.constant 0 : index
    %c0_111 = arith.constant 0 : index
    %392 = vector.load %arg4[%c0_109, %c0_110, %c0_111] : memref<9x8x8xf32, #tpu.memory_space<vmem>>, vector<1x8x8xf32>
    %393 = vector.shape_cast %392 : vector<1x8x8xf32> to vector<8x8xf32>
    %394 = vector.extract_strided_slice %393 {offsets = [0, 0], sizes = [8, 1], strides = [1, 1]} : vector<8x8xf32> to vector<8x1xf32>
    %395 = vector.broadcast %394 : vector<8x1xf32> to vector<8x256xf32>
    %396 = arith.mulf %395, %391 : vector<8x256xf32>
    %397 = arith.addf %387, %396 : vector<8x256xf32>
    %c1_i32_112 = arith.constant 1 : i32
    %398 = tpu.dynamic_rotate %391 by %c1_i32_112 dim 0 : vector<8x256xf32>, i32 -> vector<8x256xf32>
    %399 = vector.extract_strided_slice %393 {offsets = [0, 1], sizes = [8, 1], strides = [1, 1]} : vector<8x8xf32> to vector<8x1xf32>
    %400 = vector.broadcast %399 : vector<8x1xf32> to vector<8x256xf32>
    %401 = arith.mulf %400, %398 : vector<8x256xf32>
    %402 = arith.addf %397, %401 : vector<8x256xf32>
    %c2_i32_113 = arith.constant 2 : i32
    %403 = tpu.dynamic_rotate %391 by %c2_i32_113 dim 0 : vector<8x256xf32>, i32 -> vector<8x256xf32>
    %404 = vector.extract_strided_slice %393 {offsets = [0, 2], sizes = [8, 1], strides = [1, 1]} : vector<8x8xf32> to vector<8x1xf32>
    %405 = vector.broadcast %404 : vector<8x1xf32> to vector<8x256xf32>
    %406 = arith.mulf %405, %403 : vector<8x256xf32>
    %407 = arith.addf %402, %406 : vector<8x256xf32>
    %c3_i32_114 = arith.constant 3 : i32
    %408 = tpu.dynamic_rotate %391 by %c3_i32_114 dim 0 : vector<8x256xf32>, i32 -> vector<8x256xf32>
    %409 = vector.extract_strided_slice %393 {offsets = [0, 3], sizes = [8, 1], strides = [1, 1]} : vector<8x8xf32> to vector<8x1xf32>
    %410 = vector.broadcast %409 : vector<8x1xf32> to vector<8x256xf32>
    %411 = arith.mulf %410, %408 : vector<8x256xf32>
    %412 = arith.addf %407, %411 : vector<8x256xf32>
    %c5_i32_115 = arith.constant 5 : i32
    %413 = tpu.dynamic_rotate %391 by %c5_i32_115 dim 0 : vector<8x256xf32>, i32 -> vector<8x256xf32>
    %414 = vector.extract_strided_slice %393 {offsets = [0, 5], sizes = [8, 1], strides = [1, 1]} : vector<8x8xf32> to vector<8x1xf32>
    %415 = vector.broadcast %414 : vector<8x1xf32> to vector<8x256xf32>
    %416 = arith.mulf %415, %413 : vector<8x256xf32>
    %417 = arith.addf %412, %416 : vector<8x256xf32>
    %c6_i32_116 = arith.constant 6 : i32
    %418 = tpu.dynamic_rotate %391 by %c6_i32_116 dim 0 : vector<8x256xf32>, i32 -> vector<8x256xf32>
    %419 = vector.extract_strided_slice %393 {offsets = [0, 6], sizes = [8, 1], strides = [1, 1]} : vector<8x8xf32> to vector<8x1xf32>
    %420 = vector.broadcast %419 : vector<8x1xf32> to vector<8x256xf32>
    %421 = arith.mulf %420, %418 : vector<8x256xf32>
    %422 = arith.addf %417, %421 : vector<8x256xf32>
    %c7_i32_117 = arith.constant 7 : i32
    %423 = tpu.dynamic_rotate %391 by %c7_i32_117 dim 0 : vector<8x256xf32>, i32 -> vector<8x256xf32>
    %424 = vector.extract_strided_slice %393 {offsets = [0, 7], sizes = [8, 1], strides = [1, 1]} : vector<8x8xf32> to vector<8x1xf32>
    %425 = vector.broadcast %424 : vector<8x1xf32> to vector<8x256xf32>
    %426 = arith.mulf %425, %423 : vector<8x256xf32>
    %427 = arith.addf %422, %426 : vector<8x256xf32>
    %c1_118 = arith.constant 1 : index
    %c0_119 = arith.constant 0 : index
    %c0_120 = arith.constant 0 : index
    %428 = vector.load %arg2[%c1_118, %c0_119, %c0_120] : memref<9x8x256xf32, #tpu.memory_space<vmem>>, vector<1x8x256xf32>
    %429 = vector.shape_cast %428 : vector<1x8x256xf32> to vector<8x256xf32>
    %c16_i32_121 = arith.constant 16 : i32
    %430 = tpu.dynamic_rotate %386 by %c16_i32_121 dim 1 : vector<8x256xf32>, i32 -> vector<8x256xf32>
    %431 = arith.mulf %429, %430 : vector<8x256xf32>
    %c1_122 = arith.constant 1 : index
    %c0_123 = arith.constant 0 : index
    %c0_124 = arith.constant 0 : index
    %432 = vector.load %arg4[%c1_122, %c0_123, %c0_124] : memref<9x8x8xf32, #tpu.memory_space<vmem>>, vector<1x8x8xf32>
    %433 = vector.shape_cast %432 : vector<1x8x8xf32> to vector<8x8xf32>
    %434 = vector.extract_strided_slice %433 {offsets = [0, 0], sizes = [8, 1], strides = [1, 1]} : vector<8x8xf32> to vector<8x1xf32>
    %435 = vector.broadcast %434 : vector<8x1xf32> to vector<8x256xf32>
    %436 = arith.mulf %435, %431 : vector<8x256xf32>
    %437 = arith.addf %427, %436 : vector<8x256xf32>
    %c1_i32_125 = arith.constant 1 : i32
    %438 = tpu.dynamic_rotate %431 by %c1_i32_125 dim 0 : vector<8x256xf32>, i32 -> vector<8x256xf32>
    %439 = vector.extract_strided_slice %433 {offsets = [0, 1], sizes = [8, 1], strides = [1, 1]} : vector<8x8xf32> to vector<8x1xf32>
    %440 = vector.broadcast %439 : vector<8x1xf32> to vector<8x256xf32>
    %441 = arith.mulf %440, %438 : vector<8x256xf32>
    %442 = arith.addf %437, %441 : vector<8x256xf32>
    %c2_i32_126 = arith.constant 2 : i32
    %443 = tpu.dynamic_rotate %431 by %c2_i32_126 dim 0 : vector<8x256xf32>, i32 -> vector<8x256xf32>
    %444 = vector.extract_strided_slice %433 {offsets = [0, 2], sizes = [8, 1], strides = [1, 1]} : vector<8x8xf32> to vector<8x1xf32>
    %445 = vector.broadcast %444 : vector<8x1xf32> to vector<8x256xf32>
    %446 = arith.mulf %445, %443 : vector<8x256xf32>
    %447 = arith.addf %442, %446 : vector<8x256xf32>
    %c3_i32_127 = arith.constant 3 : i32
    %448 = tpu.dynamic_rotate %431 by %c3_i32_127 dim 0 : vector<8x256xf32>, i32 -> vector<8x256xf32>
    %449 = vector.extract_strided_slice %433 {offsets = [0, 3], sizes = [8, 1], strides = [1, 1]} : vector<8x8xf32> to vector<8x1xf32>
    %450 = vector.broadcast %449 : vector<8x1xf32> to vector<8x256xf32>
    %451 = arith.mulf %450, %448 : vector<8x256xf32>
    %452 = arith.addf %447, %451 : vector<8x256xf32>
    %c5_i32_128 = arith.constant 5 : i32
    %453 = tpu.dynamic_rotate %431 by %c5_i32_128 dim 0 : vector<8x256xf32>, i32 -> vector<8x256xf32>
    %454 = vector.extract_strided_slice %433 {offsets = [0, 5], sizes = [8, 1], strides = [1, 1]} : vector<8x8xf32> to vector<8x1xf32>
    %455 = vector.broadcast %454 : vector<8x1xf32> to vector<8x256xf32>
    %456 = arith.mulf %455, %453 : vector<8x256xf32>
    %457 = arith.addf %452, %456 : vector<8x256xf32>
    %c6_i32_129 = arith.constant 6 : i32
    %458 = tpu.dynamic_rotate %431 by %c6_i32_129 dim 0 : vector<8x256xf32>, i32 -> vector<8x256xf32>
    %459 = vector.extract_strided_slice %433 {offsets = [0, 6], sizes = [8, 1], strides = [1, 1]} : vector<8x8xf32> to vector<8x1xf32>
    %460 = vector.broadcast %459 : vector<8x1xf32> to vector<8x256xf32>
    %461 = arith.mulf %460, %458 : vector<8x256xf32>
    %462 = arith.addf %457, %461 : vector<8x256xf32>
    %c7_i32_130 = arith.constant 7 : i32
    %463 = tpu.dynamic_rotate %431 by %c7_i32_130 dim 0 : vector<8x256xf32>, i32 -> vector<8x256xf32>
    %464 = vector.extract_strided_slice %433 {offsets = [0, 7], sizes = [8, 1], strides = [1, 1]} : vector<8x8xf32> to vector<8x1xf32>
    %465 = vector.broadcast %464 : vector<8x1xf32> to vector<8x256xf32>
    %466 = arith.mulf %465, %463 : vector<8x256xf32>
    %467 = arith.addf %462, %466 : vector<8x256xf32>
    %c2_131 = arith.constant 2 : index
    %c0_132 = arith.constant 0 : index
    %c0_133 = arith.constant 0 : index
    %468 = vector.load %arg2[%c2_131, %c0_132, %c0_133] : memref<9x8x256xf32, #tpu.memory_space<vmem>>, vector<1x8x256xf32>
    %469 = vector.shape_cast %468 : vector<1x8x256xf32> to vector<8x256xf32>
    %c15_i32_134 = arith.constant 15 : i32
    %470 = tpu.dynamic_rotate %386 by %c15_i32_134 dim 1 : vector<8x256xf32>, i32 -> vector<8x256xf32>
    %471 = arith.mulf %469, %470 : vector<8x256xf32>
    %c2_135 = arith.constant 2 : index
    %c0_136 = arith.constant 0 : index
    %c0_137 = arith.constant 0 : index
    %472 = vector.load %arg4[%c2_135, %c0_136, %c0_137] : memref<9x8x8xf32, #tpu.memory_space<vmem>>, vector<1x8x8xf32>
    %473 = vector.shape_cast %472 : vector<1x8x8xf32> to vector<8x8xf32>
    %474 = vector.extract_strided_slice %473 {offsets = [0, 0], sizes = [8, 1], strides = [1, 1]} : vector<8x8xf32> to vector<8x1xf32>
    %475 = vector.broadcast %474 : vector<8x1xf32> to vector<8x256xf32>
    %476 = arith.mulf %475, %471 : vector<8x256xf32>
    %477 = arith.addf %467, %476 : vector<8x256xf32>
    %c1_i32_138 = arith.constant 1 : i32
    %478 = tpu.dynamic_rotate %471 by %c1_i32_138 dim 0 : vector<8x256xf32>, i32 -> vector<8x256xf32>
    %479 = vector.extract_strided_slice %473 {offsets = [0, 1], sizes = [8, 1], strides = [1, 1]} : vector<8x8xf32> to vector<8x1xf32>
    %480 = vector.broadcast %479 : vector<8x1xf32> to vector<8x256xf32>
    %481 = arith.mulf %480, %478 : vector<8x256xf32>
    %482 = arith.addf %477, %481 : vector<8x256xf32>
    %c2_i32_139 = arith.constant 2 : i32
    %483 = tpu.dynamic_rotate %471 by %c2_i32_139 dim 0 : vector<8x256xf32>, i32 -> vector<8x256xf32>
    %484 = vector.extract_strided_slice %473 {offsets = [0, 2], sizes = [8, 1], strides = [1, 1]} : vector<8x8xf32> to vector<8x1xf32>
    %485 = vector.broadcast %484 : vector<8x1xf32> to vector<8x256xf32>
    %486 = arith.mulf %485, %483 : vector<8x256xf32>
    %487 = arith.addf %482, %486 : vector<8x256xf32>
    %c3_i32_140 = arith.constant 3 : i32
    %488 = tpu.dynamic_rotate %471 by %c3_i32_140 dim 0 : vector<8x256xf32>, i32 -> vector<8x256xf32>
    %489 = vector.extract_strided_slice %473 {offsets = [0, 3], sizes = [8, 1], strides = [1, 1]} : vector<8x8xf32> to vector<8x1xf32>
    %490 = vector.broadcast %489 : vector<8x1xf32> to vector<8x256xf32>
    %491 = arith.mulf %490, %488 : vector<8x256xf32>
    %492 = arith.addf %487, %491 : vector<8x256xf32>
    %c5_i32_141 = arith.constant 5 : i32
    %493 = tpu.dynamic_rotate %471 by %c5_i32_141 dim 0 : vector<8x256xf32>, i32 -> vector<8x256xf32>
    %494 = vector.extract_strided_slice %473 {offsets = [0, 5], sizes = [8, 1], strides = [1, 1]} : vector<8x8xf32> to vector<8x1xf32>
    %495 = vector.broadcast %494 : vector<8x1xf32> to vector<8x256xf32>
    %496 = arith.mulf %495, %493 : vector<8x256xf32>
    %497 = arith.addf %492, %496 : vector<8x256xf32>
    %c6_i32_142 = arith.constant 6 : i32
    %498 = tpu.dynamic_rotate %471 by %c6_i32_142 dim 0 : vector<8x256xf32>, i32 -> vector<8x256xf32>
    %499 = vector.extract_strided_slice %473 {offsets = [0, 6], sizes = [8, 1], strides = [1, 1]} : vector<8x8xf32> to vector<8x1xf32>
    %500 = vector.broadcast %499 : vector<8x1xf32> to vector<8x256xf32>
    %501 = arith.mulf %500, %498 : vector<8x256xf32>
    %502 = arith.addf %497, %501 : vector<8x256xf32>
    %c7_i32_143 = arith.constant 7 : i32
    %503 = tpu.dynamic_rotate %471 by %c7_i32_143 dim 0 : vector<8x256xf32>, i32 -> vector<8x256xf32>
    %504 = vector.extract_strided_slice %473 {offsets = [0, 7], sizes = [8, 1], strides = [1, 1]} : vector<8x8xf32> to vector<8x1xf32>
    %505 = vector.broadcast %504 : vector<8x1xf32> to vector<8x256xf32>
    %506 = arith.mulf %505, %503 : vector<8x256xf32>
    %507 = arith.addf %502, %506 : vector<8x256xf32>
    %c3_144 = arith.constant 3 : index
    %c0_145 = arith.constant 0 : index
    %c0_146 = arith.constant 0 : index
    %508 = vector.load %arg2[%c3_144, %c0_145, %c0_146] : memref<9x8x256xf32, #tpu.memory_space<vmem>>, vector<1x8x256xf32>
    %509 = vector.shape_cast %508 : vector<1x8x256xf32> to vector<8x256xf32>
    %c1_i32_147 = arith.constant 1 : i32
    %510 = tpu.dynamic_rotate %386 by %c1_i32_147 dim 1 : vector<8x256xf32>, i32 -> vector<8x256xf32>
    %511 = arith.mulf %509, %510 : vector<8x256xf32>
    %c3_148 = arith.constant 3 : index
    %c0_149 = arith.constant 0 : index
    %c0_150 = arith.constant 0 : index
    %512 = vector.load %arg4[%c3_148, %c0_149, %c0_150] : memref<9x8x8xf32, #tpu.memory_space<vmem>>, vector<1x8x8xf32>
    %513 = vector.shape_cast %512 : vector<1x8x8xf32> to vector<8x8xf32>
    %514 = vector.extract_strided_slice %513 {offsets = [0, 0], sizes = [8, 1], strides = [1, 1]} : vector<8x8xf32> to vector<8x1xf32>
    %515 = vector.broadcast %514 : vector<8x1xf32> to vector<8x256xf32>
    %516 = arith.mulf %515, %511 : vector<8x256xf32>
    %517 = arith.addf %507, %516 : vector<8x256xf32>
    %c1_i32_151 = arith.constant 1 : i32
    %518 = tpu.dynamic_rotate %511 by %c1_i32_151 dim 0 : vector<8x256xf32>, i32 -> vector<8x256xf32>
    %519 = vector.extract_strided_slice %513 {offsets = [0, 1], sizes = [8, 1], strides = [1, 1]} : vector<8x8xf32> to vector<8x1xf32>
    %520 = vector.broadcast %519 : vector<8x1xf32> to vector<8x256xf32>
    %521 = arith.mulf %520, %518 : vector<8x256xf32>
    %522 = arith.addf %517, %521 : vector<8x256xf32>
    %c2_i32_152 = arith.constant 2 : i32
    %523 = tpu.dynamic_rotate %511 by %c2_i32_152 dim 0 : vector<8x256xf32>, i32 -> vector<8x256xf32>
    %524 = vector.extract_strided_slice %513 {offsets = [0, 2], sizes = [8, 1], strides = [1, 1]} : vector<8x8xf32> to vector<8x1xf32>
    %525 = vector.broadcast %524 : vector<8x1xf32> to vector<8x256xf32>
    %526 = arith.mulf %525, %523 : vector<8x256xf32>
    %527 = arith.addf %522, %526 : vector<8x256xf32>
    %c3_i32_153 = arith.constant 3 : i32
    %528 = tpu.dynamic_rotate %511 by %c3_i32_153 dim 0 : vector<8x256xf32>, i32 -> vector<8x256xf32>
    %529 = vector.extract_strided_slice %513 {offsets = [0, 3], sizes = [8, 1], strides = [1, 1]} : vector<8x8xf32> to vector<8x1xf32>
    %530 = vector.broadcast %529 : vector<8x1xf32> to vector<8x256xf32>
    %531 = arith.mulf %530, %528 : vector<8x256xf32>
    %532 = arith.addf %527, %531 : vector<8x256xf32>
    %c5_i32_154 = arith.constant 5 : i32
    %533 = tpu.dynamic_rotate %511 by %c5_i32_154 dim 0 : vector<8x256xf32>, i32 -> vector<8x256xf32>
    %534 = vector.extract_strided_slice %513 {offsets = [0, 5], sizes = [8, 1], strides = [1, 1]} : vector<8x8xf32> to vector<8x1xf32>
    %535 = vector.broadcast %534 : vector<8x1xf32> to vector<8x256xf32>
    %536 = arith.mulf %535, %533 : vector<8x256xf32>
    %537 = arith.addf %532, %536 : vector<8x256xf32>
    %c6_i32_155 = arith.constant 6 : i32
    %538 = tpu.dynamic_rotate %511 by %c6_i32_155 dim 0 : vector<8x256xf32>, i32 -> vector<8x256xf32>
    %539 = vector.extract_strided_slice %513 {offsets = [0, 6], sizes = [8, 1], strides = [1, 1]} : vector<8x8xf32> to vector<8x1xf32>
    %540 = vector.broadcast %539 : vector<8x1xf32> to vector<8x256xf32>
    %541 = arith.mulf %540, %538 : vector<8x256xf32>
    %542 = arith.addf %537, %541 : vector<8x256xf32>
    %c7_i32_156 = arith.constant 7 : i32
    %543 = tpu.dynamic_rotate %511 by %c7_i32_156 dim 0 : vector<8x256xf32>, i32 -> vector<8x256xf32>
    %544 = vector.extract_strided_slice %513 {offsets = [0, 7], sizes = [8, 1], strides = [1, 1]} : vector<8x8xf32> to vector<8x1xf32>
    %545 = vector.broadcast %544 : vector<8x1xf32> to vector<8x256xf32>
    %546 = arith.mulf %545, %543 : vector<8x256xf32>
    %547 = arith.addf %542, %546 : vector<8x256xf32>
    %c4_157 = arith.constant 4 : index
    %c0_158 = arith.constant 0 : index
    %c0_159 = arith.constant 0 : index
    %548 = vector.load %arg4[%c4_157, %c0_158, %c0_159] : memref<9x8x8xf32, #tpu.memory_space<vmem>>, vector<1x8x8xf32>
    %549 = vector.shape_cast %548 : vector<1x8x8xf32> to vector<8x8xf32>
    %550 = vector.extract_strided_slice %549 {offsets = [0, 0], sizes = [8, 1], strides = [1, 1]} : vector<8x8xf32> to vector<8x1xf32>
    %551 = vector.broadcast %550 : vector<8x1xf32> to vector<8x256xf32>
    %552 = arith.mulf %551, %386 : vector<8x256xf32>
    %553 = arith.addf %547, %552 : vector<8x256xf32>
    %c1_i32_160 = arith.constant 1 : i32
    %554 = tpu.dynamic_rotate %386 by %c1_i32_160 dim 0 : vector<8x256xf32>, i32 -> vector<8x256xf32>
    %555 = vector.extract_strided_slice %549 {offsets = [0, 1], sizes = [8, 1], strides = [1, 1]} : vector<8x8xf32> to vector<8x1xf32>
    %556 = vector.broadcast %555 : vector<8x1xf32> to vector<8x256xf32>
    %557 = arith.mulf %556, %554 : vector<8x256xf32>
    %558 = arith.addf %553, %557 : vector<8x256xf32>
    %c2_i32_161 = arith.constant 2 : i32
    %559 = tpu.dynamic_rotate %386 by %c2_i32_161 dim 0 : vector<8x256xf32>, i32 -> vector<8x256xf32>
    %560 = vector.extract_strided_slice %549 {offsets = [0, 2], sizes = [8, 1], strides = [1, 1]} : vector<8x8xf32> to vector<8x1xf32>
    %561 = vector.broadcast %560 : vector<8x1xf32> to vector<8x256xf32>
    %562 = arith.mulf %561, %559 : vector<8x256xf32>
    %563 = arith.addf %558, %562 : vector<8x256xf32>
    %c3_i32_162 = arith.constant 3 : i32
    %564 = tpu.dynamic_rotate %386 by %c3_i32_162 dim 0 : vector<8x256xf32>, i32 -> vector<8x256xf32>
    %565 = vector.extract_strided_slice %549 {offsets = [0, 3], sizes = [8, 1], strides = [1, 1]} : vector<8x8xf32> to vector<8x1xf32>
    %566 = vector.broadcast %565 : vector<8x1xf32> to vector<8x256xf32>
    %567 = arith.mulf %566, %564 : vector<8x256xf32>
    %568 = arith.addf %563, %567 : vector<8x256xf32>
    %c5_i32_163 = arith.constant 5 : i32
    %569 = tpu.dynamic_rotate %386 by %c5_i32_163 dim 0 : vector<8x256xf32>, i32 -> vector<8x256xf32>
    %570 = vector.extract_strided_slice %549 {offsets = [0, 5], sizes = [8, 1], strides = [1, 1]} : vector<8x8xf32> to vector<8x1xf32>
    %571 = vector.broadcast %570 : vector<8x1xf32> to vector<8x256xf32>
    %572 = arith.mulf %571, %569 : vector<8x256xf32>
    %573 = arith.addf %568, %572 : vector<8x256xf32>
    %c6_i32_164 = arith.constant 6 : i32
    %574 = tpu.dynamic_rotate %386 by %c6_i32_164 dim 0 : vector<8x256xf32>, i32 -> vector<8x256xf32>
    %575 = vector.extract_strided_slice %549 {offsets = [0, 6], sizes = [8, 1], strides = [1, 1]} : vector<8x8xf32> to vector<8x1xf32>
    %576 = vector.broadcast %575 : vector<8x1xf32> to vector<8x256xf32>
    %577 = arith.mulf %576, %574 : vector<8x256xf32>
    %578 = arith.addf %573, %577 : vector<8x256xf32>
    %c7_i32_165 = arith.constant 7 : i32
    %579 = tpu.dynamic_rotate %386 by %c7_i32_165 dim 0 : vector<8x256xf32>, i32 -> vector<8x256xf32>
    %580 = vector.extract_strided_slice %549 {offsets = [0, 7], sizes = [8, 1], strides = [1, 1]} : vector<8x8xf32> to vector<8x1xf32>
    %581 = vector.broadcast %580 : vector<8x1xf32> to vector<8x256xf32>
    %582 = arith.mulf %581, %579 : vector<8x256xf32>
    %583 = arith.addf %578, %582 : vector<8x256xf32>
    %c5_166 = arith.constant 5 : index
    %c0_167 = arith.constant 0 : index
    %c0_168 = arith.constant 0 : index
    %584 = vector.load %arg2[%c5_166, %c0_167, %c0_168] : memref<9x8x256xf32, #tpu.memory_space<vmem>>, vector<1x8x256xf32>
    %585 = vector.shape_cast %584 : vector<1x8x256xf32> to vector<8x256xf32>
    %c255_i32_169 = arith.constant 255 : i32
    %586 = tpu.dynamic_rotate %386 by %c255_i32_169 dim 1 : vector<8x256xf32>, i32 -> vector<8x256xf32>
    %587 = arith.mulf %585, %586 : vector<8x256xf32>
    %c5_170 = arith.constant 5 : index
    %c0_171 = arith.constant 0 : index
    %c0_172 = arith.constant 0 : index
    %588 = vector.load %arg4[%c5_170, %c0_171, %c0_172] : memref<9x8x8xf32, #tpu.memory_space<vmem>>, vector<1x8x8xf32>
    %589 = vector.shape_cast %588 : vector<1x8x8xf32> to vector<8x8xf32>
    %590 = vector.extract_strided_slice %589 {offsets = [0, 0], sizes = [8, 1], strides = [1, 1]} : vector<8x8xf32> to vector<8x1xf32>
    %591 = vector.broadcast %590 : vector<8x1xf32> to vector<8x256xf32>
    %592 = arith.mulf %591, %587 : vector<8x256xf32>
    %593 = arith.addf %583, %592 : vector<8x256xf32>
    %c1_i32_173 = arith.constant 1 : i32
    %594 = tpu.dynamic_rotate %587 by %c1_i32_173 dim 0 : vector<8x256xf32>, i32 -> vector<8x256xf32>
    %595 = vector.extract_strided_slice %589 {offsets = [0, 1], sizes = [8, 1], strides = [1, 1]} : vector<8x8xf32> to vector<8x1xf32>
    %596 = vector.broadcast %595 : vector<8x1xf32> to vector<8x256xf32>
    %597 = arith.mulf %596, %594 : vector<8x256xf32>
    %598 = arith.addf %593, %597 : vector<8x256xf32>
    %c2_i32_174 = arith.constant 2 : i32
    %599 = tpu.dynamic_rotate %587 by %c2_i32_174 dim 0 : vector<8x256xf32>, i32 -> vector<8x256xf32>
    %600 = vector.extract_strided_slice %589 {offsets = [0, 2], sizes = [8, 1], strides = [1, 1]} : vector<8x8xf32> to vector<8x1xf32>
    %601 = vector.broadcast %600 : vector<8x1xf32> to vector<8x256xf32>
    %602 = arith.mulf %601, %599 : vector<8x256xf32>
    %603 = arith.addf %598, %602 : vector<8x256xf32>
    %c3_i32_175 = arith.constant 3 : i32
    %604 = tpu.dynamic_rotate %587 by %c3_i32_175 dim 0 : vector<8x256xf32>, i32 -> vector<8x256xf32>
    %605 = vector.extract_strided_slice %589 {offsets = [0, 3], sizes = [8, 1], strides = [1, 1]} : vector<8x8xf32> to vector<8x1xf32>
    %606 = vector.broadcast %605 : vector<8x1xf32> to vector<8x256xf32>
    %607 = arith.mulf %606, %604 : vector<8x256xf32>
    %608 = arith.addf %603, %607 : vector<8x256xf32>
    %c5_i32_176 = arith.constant 5 : i32
    %609 = tpu.dynamic_rotate %587 by %c5_i32_176 dim 0 : vector<8x256xf32>, i32 -> vector<8x256xf32>
    %610 = vector.extract_strided_slice %589 {offsets = [0, 5], sizes = [8, 1], strides = [1, 1]} : vector<8x8xf32> to vector<8x1xf32>
    %611 = vector.broadcast %610 : vector<8x1xf32> to vector<8x256xf32>
    %612 = arith.mulf %611, %609 : vector<8x256xf32>
    %613 = arith.addf %608, %612 : vector<8x256xf32>
    %c6_i32_177 = arith.constant 6 : i32
    %614 = tpu.dynamic_rotate %587 by %c6_i32_177 dim 0 : vector<8x256xf32>, i32 -> vector<8x256xf32>
    %615 = vector.extract_strided_slice %589 {offsets = [0, 6], sizes = [8, 1], strides = [1, 1]} : vector<8x8xf32> to vector<8x1xf32>
    %616 = vector.broadcast %615 : vector<8x1xf32> to vector<8x256xf32>
    %617 = arith.mulf %616, %614 : vector<8x256xf32>
    %618 = arith.addf %613, %617 : vector<8x256xf32>
    %c7_i32_178 = arith.constant 7 : i32
    %619 = tpu.dynamic_rotate %587 by %c7_i32_178 dim 0 : vector<8x256xf32>, i32 -> vector<8x256xf32>
    %620 = vector.extract_strided_slice %589 {offsets = [0, 7], sizes = [8, 1], strides = [1, 1]} : vector<8x8xf32> to vector<8x1xf32>
    %621 = vector.broadcast %620 : vector<8x1xf32> to vector<8x256xf32>
    %622 = arith.mulf %621, %619 : vector<8x256xf32>
    %623 = arith.addf %618, %622 : vector<8x256xf32>
    %c6_179 = arith.constant 6 : index
    %c0_180 = arith.constant 0 : index
    %c0_181 = arith.constant 0 : index
    %624 = vector.load %arg2[%c6_179, %c0_180, %c0_181] : memref<9x8x256xf32, #tpu.memory_space<vmem>>, vector<1x8x256xf32>
    %625 = vector.shape_cast %624 : vector<1x8x256xf32> to vector<8x256xf32>
    %c241_i32_182 = arith.constant 241 : i32
    %626 = tpu.dynamic_rotate %386 by %c241_i32_182 dim 1 : vector<8x256xf32>, i32 -> vector<8x256xf32>
    %627 = arith.mulf %625, %626 : vector<8x256xf32>
    %c6_183 = arith.constant 6 : index
    %c0_184 = arith.constant 0 : index
    %c0_185 = arith.constant 0 : index
    %628 = vector.load %arg4[%c6_183, %c0_184, %c0_185] : memref<9x8x8xf32, #tpu.memory_space<vmem>>, vector<1x8x8xf32>
    %629 = vector.shape_cast %628 : vector<1x8x8xf32> to vector<8x8xf32>
    %630 = vector.extract_strided_slice %629 {offsets = [0, 0], sizes = [8, 1], strides = [1, 1]} : vector<8x8xf32> to vector<8x1xf32>
    %631 = vector.broadcast %630 : vector<8x1xf32> to vector<8x256xf32>
    %632 = arith.mulf %631, %627 : vector<8x256xf32>
    %633 = arith.addf %623, %632 : vector<8x256xf32>
    %c1_i32_186 = arith.constant 1 : i32
    %634 = tpu.dynamic_rotate %627 by %c1_i32_186 dim 0 : vector<8x256xf32>, i32 -> vector<8x256xf32>
    %635 = vector.extract_strided_slice %629 {offsets = [0, 1], sizes = [8, 1], strides = [1, 1]} : vector<8x8xf32> to vector<8x1xf32>
    %636 = vector.broadcast %635 : vector<8x1xf32> to vector<8x256xf32>
    %637 = arith.mulf %636, %634 : vector<8x256xf32>
    %638 = arith.addf %633, %637 : vector<8x256xf32>
    %c2_i32_187 = arith.constant 2 : i32
    %639 = tpu.dynamic_rotate %627 by %c2_i32_187 dim 0 : vector<8x256xf32>, i32 -> vector<8x256xf32>
    %640 = vector.extract_strided_slice %629 {offsets = [0, 2], sizes = [8, 1], strides = [1, 1]} : vector<8x8xf32> to vector<8x1xf32>
    %641 = vector.broadcast %640 : vector<8x1xf32> to vector<8x256xf32>
    %642 = arith.mulf %641, %639 : vector<8x256xf32>
    %643 = arith.addf %638, %642 : vector<8x256xf32>
    %c3_i32_188 = arith.constant 3 : i32
    %644 = tpu.dynamic_rotate %627 by %c3_i32_188 dim 0 : vector<8x256xf32>, i32 -> vector<8x256xf32>
    %645 = vector.extract_strided_slice %629 {offsets = [0, 3], sizes = [8, 1], strides = [1, 1]} : vector<8x8xf32> to vector<8x1xf32>
    %646 = vector.broadcast %645 : vector<8x1xf32> to vector<8x256xf32>
    %647 = arith.mulf %646, %644 : vector<8x256xf32>
    %648 = arith.addf %643, %647 : vector<8x256xf32>
    %c5_i32_189 = arith.constant 5 : i32
    %649 = tpu.dynamic_rotate %627 by %c5_i32_189 dim 0 : vector<8x256xf32>, i32 -> vector<8x256xf32>
    %650 = vector.extract_strided_slice %629 {offsets = [0, 5], sizes = [8, 1], strides = [1, 1]} : vector<8x8xf32> to vector<8x1xf32>
    %651 = vector.broadcast %650 : vector<8x1xf32> to vector<8x256xf32>
    %652 = arith.mulf %651, %649 : vector<8x256xf32>
    %653 = arith.addf %648, %652 : vector<8x256xf32>
    %c6_i32_190 = arith.constant 6 : i32
    %654 = tpu.dynamic_rotate %627 by %c6_i32_190 dim 0 : vector<8x256xf32>, i32 -> vector<8x256xf32>
    %655 = vector.extract_strided_slice %629 {offsets = [0, 6], sizes = [8, 1], strides = [1, 1]} : vector<8x8xf32> to vector<8x1xf32>
    %656 = vector.broadcast %655 : vector<8x1xf32> to vector<8x256xf32>
    %657 = arith.mulf %656, %654 : vector<8x256xf32>
    %658 = arith.addf %653, %657 : vector<8x256xf32>
    %c7_i32_191 = arith.constant 7 : i32
    %659 = tpu.dynamic_rotate %627 by %c7_i32_191 dim 0 : vector<8x256xf32>, i32 -> vector<8x256xf32>
    %660 = vector.extract_strided_slice %629 {offsets = [0, 7], sizes = [8, 1], strides = [1, 1]} : vector<8x8xf32> to vector<8x1xf32>
    %661 = vector.broadcast %660 : vector<8x1xf32> to vector<8x256xf32>
    %662 = arith.mulf %661, %659 : vector<8x256xf32>
    %663 = arith.addf %658, %662 : vector<8x256xf32>
    %c7_192 = arith.constant 7 : index
    %c0_193 = arith.constant 0 : index
    %c0_194 = arith.constant 0 : index
    %664 = vector.load %arg2[%c7_192, %c0_193, %c0_194] : memref<9x8x256xf32, #tpu.memory_space<vmem>>, vector<1x8x256xf32>
    %665 = vector.shape_cast %664 : vector<1x8x256xf32> to vector<8x256xf32>
    %c240_i32_195 = arith.constant 240 : i32
    %666 = tpu.dynamic_rotate %386 by %c240_i32_195 dim 1 : vector<8x256xf32>, i32 -> vector<8x256xf32>
    %667 = arith.mulf %665, %666 : vector<8x256xf32>
    %c7_196 = arith.constant 7 : index
    %c0_197 = arith.constant 0 : index
    %c0_198 = arith.constant 0 : index
    %668 = vector.load %arg4[%c7_196, %c0_197, %c0_198] : memref<9x8x8xf32, #tpu.memory_space<vmem>>, vector<1x8x8xf32>
    %669 = vector.shape_cast %668 : vector<1x8x8xf32> to vector<8x8xf32>
    %670 = vector.extract_strided_slice %669 {offsets = [0, 0], sizes = [8, 1], strides = [1, 1]} : vector<8x8xf32> to vector<8x1xf32>
    %671 = vector.broadcast %670 : vector<8x1xf32> to vector<8x256xf32>
    %672 = arith.mulf %671, %667 : vector<8x256xf32>
    %673 = arith.addf %663, %672 : vector<8x256xf32>
    %c1_i32_199 = arith.constant 1 : i32
    %674 = tpu.dynamic_rotate %667 by %c1_i32_199 dim 0 : vector<8x256xf32>, i32 -> vector<8x256xf32>
    %675 = vector.extract_strided_slice %669 {offsets = [0, 1], sizes = [8, 1], strides = [1, 1]} : vector<8x8xf32> to vector<8x1xf32>
    %676 = vector.broadcast %675 : vector<8x1xf32> to vector<8x256xf32>
    %677 = arith.mulf %676, %674 : vector<8x256xf32>
    %678 = arith.addf %673, %677 : vector<8x256xf32>
    %c2_i32_200 = arith.constant 2 : i32
    %679 = tpu.dynamic_rotate %667 by %c2_i32_200 dim 0 : vector<8x256xf32>, i32 -> vector<8x256xf32>
    %680 = vector.extract_strided_slice %669 {offsets = [0, 2], sizes = [8, 1], strides = [1, 1]} : vector<8x8xf32> to vector<8x1xf32>
    %681 = vector.broadcast %680 : vector<8x1xf32> to vector<8x256xf32>
    %682 = arith.mulf %681, %679 : vector<8x256xf32>
    %683 = arith.addf %678, %682 : vector<8x256xf32>
    %c3_i32_201 = arith.constant 3 : i32
    %684 = tpu.dynamic_rotate %667 by %c3_i32_201 dim 0 : vector<8x256xf32>, i32 -> vector<8x256xf32>
    %685 = vector.extract_strided_slice %669 {offsets = [0, 3], sizes = [8, 1], strides = [1, 1]} : vector<8x8xf32> to vector<8x1xf32>
    %686 = vector.broadcast %685 : vector<8x1xf32> to vector<8x256xf32>
    %687 = arith.mulf %686, %684 : vector<8x256xf32>
    %688 = arith.addf %683, %687 : vector<8x256xf32>
    %c5_i32_202 = arith.constant 5 : i32
    %689 = tpu.dynamic_rotate %667 by %c5_i32_202 dim 0 : vector<8x256xf32>, i32 -> vector<8x256xf32>
    %690 = vector.extract_strided_slice %669 {offsets = [0, 5], sizes = [8, 1], strides = [1, 1]} : vector<8x8xf32> to vector<8x1xf32>
    %691 = vector.broadcast %690 : vector<8x1xf32> to vector<8x256xf32>
    %692 = arith.mulf %691, %689 : vector<8x256xf32>
    %693 = arith.addf %688, %692 : vector<8x256xf32>
    %c6_i32_203 = arith.constant 6 : i32
    %694 = tpu.dynamic_rotate %667 by %c6_i32_203 dim 0 : vector<8x256xf32>, i32 -> vector<8x256xf32>
    %695 = vector.extract_strided_slice %669 {offsets = [0, 6], sizes = [8, 1], strides = [1, 1]} : vector<8x8xf32> to vector<8x1xf32>
    %696 = vector.broadcast %695 : vector<8x1xf32> to vector<8x256xf32>
    %697 = arith.mulf %696, %694 : vector<8x256xf32>
    %698 = arith.addf %693, %697 : vector<8x256xf32>
    %c7_i32_204 = arith.constant 7 : i32
    %699 = tpu.dynamic_rotate %667 by %c7_i32_204 dim 0 : vector<8x256xf32>, i32 -> vector<8x256xf32>
    %700 = vector.extract_strided_slice %669 {offsets = [0, 7], sizes = [8, 1], strides = [1, 1]} : vector<8x8xf32> to vector<8x1xf32>
    %701 = vector.broadcast %700 : vector<8x1xf32> to vector<8x256xf32>
    %702 = arith.mulf %701, %699 : vector<8x256xf32>
    %703 = arith.addf %698, %702 : vector<8x256xf32>
    %c8_205 = arith.constant 8 : index
    %c0_206 = arith.constant 0 : index
    %c0_207 = arith.constant 0 : index
    %704 = vector.load %arg2[%c8_205, %c0_206, %c0_207] : memref<9x8x256xf32, #tpu.memory_space<vmem>>, vector<1x8x256xf32>
    %705 = vector.shape_cast %704 : vector<1x8x256xf32> to vector<8x256xf32>
    %c239_i32_208 = arith.constant 239 : i32
    %706 = tpu.dynamic_rotate %386 by %c239_i32_208 dim 1 : vector<8x256xf32>, i32 -> vector<8x256xf32>
    %707 = arith.mulf %705, %706 : vector<8x256xf32>
    %c8_209 = arith.constant 8 : index
    %c0_210 = arith.constant 0 : index
    %c0_211 = arith.constant 0 : index
    %708 = vector.load %arg4[%c8_209, %c0_210, %c0_211] : memref<9x8x8xf32, #tpu.memory_space<vmem>>, vector<1x8x8xf32>
    %709 = vector.shape_cast %708 : vector<1x8x8xf32> to vector<8x8xf32>
    %710 = vector.extract_strided_slice %709 {offsets = [0, 0], sizes = [8, 1], strides = [1, 1]} : vector<8x8xf32> to vector<8x1xf32>
    %711 = vector.broadcast %710 : vector<8x1xf32> to vector<8x256xf32>
    %712 = arith.mulf %711, %707 : vector<8x256xf32>
    %713 = arith.addf %703, %712 : vector<8x256xf32>
    %c1_i32_212 = arith.constant 1 : i32
    %714 = tpu.dynamic_rotate %707 by %c1_i32_212 dim 0 : vector<8x256xf32>, i32 -> vector<8x256xf32>
    %715 = vector.extract_strided_slice %709 {offsets = [0, 1], sizes = [8, 1], strides = [1, 1]} : vector<8x8xf32> to vector<8x1xf32>
    %716 = vector.broadcast %715 : vector<8x1xf32> to vector<8x256xf32>
    %717 = arith.mulf %716, %714 : vector<8x256xf32>
    %718 = arith.addf %713, %717 : vector<8x256xf32>
    %c2_i32_213 = arith.constant 2 : i32
    %719 = tpu.dynamic_rotate %707 by %c2_i32_213 dim 0 : vector<8x256xf32>, i32 -> vector<8x256xf32>
    %720 = vector.extract_strided_slice %709 {offsets = [0, 2], sizes = [8, 1], strides = [1, 1]} : vector<8x8xf32> to vector<8x1xf32>
    %721 = vector.broadcast %720 : vector<8x1xf32> to vector<8x256xf32>
    %722 = arith.mulf %721, %719 : vector<8x256xf32>
    %723 = arith.addf %718, %722 : vector<8x256xf32>
    %c3_i32_214 = arith.constant 3 : i32
    %724 = tpu.dynamic_rotate %707 by %c3_i32_214 dim 0 : vector<8x256xf32>, i32 -> vector<8x256xf32>
    %725 = vector.extract_strided_slice %709 {offsets = [0, 3], sizes = [8, 1], strides = [1, 1]} : vector<8x8xf32> to vector<8x1xf32>
    %726 = vector.broadcast %725 : vector<8x1xf32> to vector<8x256xf32>
    %727 = arith.mulf %726, %724 : vector<8x256xf32>
    %728 = arith.addf %723, %727 : vector<8x256xf32>
    %c5_i32_215 = arith.constant 5 : i32
    %729 = tpu.dynamic_rotate %707 by %c5_i32_215 dim 0 : vector<8x256xf32>, i32 -> vector<8x256xf32>
    %730 = vector.extract_strided_slice %709 {offsets = [0, 5], sizes = [8, 1], strides = [1, 1]} : vector<8x8xf32> to vector<8x1xf32>
    %731 = vector.broadcast %730 : vector<8x1xf32> to vector<8x256xf32>
    %732 = arith.mulf %731, %729 : vector<8x256xf32>
    %733 = arith.addf %728, %732 : vector<8x256xf32>
    %c6_i32_216 = arith.constant 6 : i32
    %734 = tpu.dynamic_rotate %707 by %c6_i32_216 dim 0 : vector<8x256xf32>, i32 -> vector<8x256xf32>
    %735 = vector.extract_strided_slice %709 {offsets = [0, 6], sizes = [8, 1], strides = [1, 1]} : vector<8x8xf32> to vector<8x1xf32>
    %736 = vector.broadcast %735 : vector<8x1xf32> to vector<8x256xf32>
    %737 = arith.mulf %736, %734 : vector<8x256xf32>
    %738 = arith.addf %733, %737 : vector<8x256xf32>
    %c7_i32_217 = arith.constant 7 : i32
    %739 = tpu.dynamic_rotate %707 by %c7_i32_217 dim 0 : vector<8x256xf32>, i32 -> vector<8x256xf32>
    %740 = vector.extract_strided_slice %709 {offsets = [0, 7], sizes = [8, 1], strides = [1, 1]} : vector<8x8xf32> to vector<8x1xf32>
    %741 = vector.broadcast %740 : vector<8x1xf32> to vector<8x256xf32>
    %742 = arith.mulf %741, %739 : vector<8x256xf32>
    %743 = arith.addf %738, %742 : vector<8x256xf32>
    %cst_218 = arith.constant dense<0.000000e+00> : vector<8xf32>
    %744 = vector.multi_reduction <add>, %743, %cst_218 [1] : vector<8x256xf32> to vector<8xf32>
    %745 = vector.shape_cast %744 : vector<8xf32> to vector<8x1xf32>
    %746 = arith.mulf %743, %743 : vector<8x256xf32>
    %cst_219 = arith.constant dense<0.000000e+00> : vector<8xf32>
    %747 = vector.multi_reduction <add>, %746, %cst_219 [1] : vector<8x256xf32> to vector<8xf32>
    %748 = vector.shape_cast %747 : vector<8xf32> to vector<8x1xf32>
    %c4_i32_220 = arith.constant 4 : i32
    %749 = tpu.dynamic_rotate %745 by %c4_i32_220 dim 0 : vector<8x1xf32>, i32 -> vector<8x1xf32>
    %750 = arith.addf %745, %749 : vector<8x1xf32>
    %c4_i32_221 = arith.constant 4 : i32
    %751 = tpu.dynamic_rotate %748 by %c4_i32_221 dim 0 : vector<8x1xf32>, i32 -> vector<8x1xf32>
    %752 = arith.addf %748, %751 : vector<8x1xf32>
    %cst_222 = arith.constant 0.001953125 : f32
    %753 = vector.broadcast %cst_222 : f32 to vector<8x1xf32>
    %754 = arith.mulf %750, %753 : vector<8x1xf32>
    %cst_223 = arith.constant 0.001953125 : f32
    %755 = vector.broadcast %cst_223 : f32 to vector<8x1xf32>
    %756 = arith.mulf %752, %755 : vector<8x1xf32>
    %757 = arith.mulf %754, %754 : vector<8x1xf32>
    %758 = arith.subf %756, %757 : vector<8x1xf32>
    %c0_224 = arith.constant 0 : index
    %c0_225 = arith.constant 0 : index
    %759 = vector.load %arg7[%c0_224, %c0_225] : memref<8x1xf32, #tpu.memory_space<vmem>>, vector<8x1xf32>
    %cst_226 = arith.constant 9.99999974E-6 : f32
    %760 = vector.broadcast %cst_226 : f32 to vector<8x1xf32>
    %761 = arith.addf %758, %760 : vector<8x1xf32>
    %762 = math.rsqrt %761 : vector<8x1xf32>
    %763 = arith.mulf %759, %762 : vector<8x1xf32>
    %c0_227 = arith.constant 0 : index
    %c0_228 = arith.constant 0 : index
    %764 = vector.load %arg8[%c0_227, %c0_228] : memref<8x1xf32, #tpu.memory_space<vmem>>, vector<8x1xf32>
    %765 = arith.mulf %754, %763 : vector<8x1xf32>
    %766 = arith.subf %764, %765 : vector<8x1xf32>
    %767 = vector.broadcast %763 : vector<8x1xf32> to vector<8x256xf32>
    %768 = arith.mulf %743, %767 : vector<8x256xf32>
    %769 = vector.broadcast %766 : vector<8x1xf32> to vector<8x256xf32>
    %770 = arith.addf %768, %769 : vector<8x256xf32>
    %771 = arith.addf %770, %0 : vector<8x256xf32>
    %cst_229 = arith.constant 0.000000e+00 : f32
    %772 = vector.broadcast %cst_229 : f32 to vector<8x256xf32>
    %773 = arith.maximumf %771, %772 : vector<8x256xf32>
    %c0_230 = arith.constant 0 : index
    %c0_231 = arith.constant 0 : index
    %774 = vector.load %arg9[%c0_230, %c0_231] : memref<8x256xf32, #tpu.memory_space<vmem>>, vector<8x256xf32>
    tpu.vector_store %arg9[%c0_230, %c0_231], %773 {strides = array<i32>} : memref<8x256xf32, #tpu.memory_space<vmem>>, vector<8x256xf32>,
    return
  }
  func.func @transform_0(%arg0: i32) -> (i32, i32) {
    %c0_i32 = arith.constant 0 : i32
    %c0_i32_0 = arith.constant 0 : i32
    %c0_i32_1 = arith.constant 0 : i32
    return %c0_i32, %c0_i32_0 : i32, i32
  }
  func.func @transform_1(%arg0: i32) -> (i32, i32, i32) {
    %c0_i32 = arith.constant 0 : i32
    %c0_i32_0 = arith.constant 0 : i32
    %c0_i32_1 = arith.constant 0 : i32
    %c0_i32_2 = arith.constant 0 : i32
    return %c0_i32, %c0_i32_0, %c0_i32_1 : i32, i32, i32
  }
  func.func @transform_2(%arg0: i32) -> (i32, i32, i32) {
    %c0_i32 = arith.constant 0 : i32
    %c0_i32_0 = arith.constant 0 : i32
    %c0_i32_1 = arith.constant 0 : i32
    %c0_i32_2 = arith.constant 0 : i32
    return %c0_i32, %c0_i32_0, %c0_i32_1 : i32, i32, i32
  }
  func.func @transform_3(%arg0: i32) -> (i32, i32, i32) {
    %c0_i32 = arith.constant 0 : i32
    %c0_i32_0 = arith.constant 0 : i32
    %c0_i32_1 = arith.constant 0 : i32
    %c0_i32_2 = arith.constant 0 : i32
    return %c0_i32, %c0_i32_0, %c0_i32_1 : i32, i32, i32
  }
  func.func @transform_4(%arg0: i32) -> (i32, i32) {
    %c0_i32 = arith.constant 0 : i32
    %c0_i32_0 = arith.constant 0 : i32
    %c0_i32_1 = arith.constant 0 : i32
    return %c0_i32, %c0_i32_0 : i32, i32
  }
  func.func @transform_5(%arg0: i32) -> (i32, i32) {
    %c0_i32 = arith.constant 0 : i32
    %c0_i32_0 = arith.constant 0 : i32
    %c0_i32_1 = arith.constant 0 : i32
    return %c0_i32, %c0_i32_0 : i32, i32
  }
  func.func @transform_6(%arg0: i32) -> (i32, i32) {
    %c0_i32 = arith.constant 0 : i32
    %c0_i32_0 = arith.constant 0 : i32
    %c0_i32_1 = arith.constant 0 : i32
    return %c0_i32, %c0_i32_0 : i32, i32
  }
  func.func @transform_7(%arg0: i32) -> (i32, i32) {
    %c0_i32 = arith.constant 0 : i32
    %c0_i32_0 = arith.constant 0 : i32
    %c0_i32_1 = arith.constant 0 : i32
    return %c0_i32, %c0_i32_0 : i32, i32
  }
  func.func @transform_8(%arg0: i32) -> (i32, i32) {
    %c0_i32 = arith.constant 0 : i32
    %c0_i32_0 = arith.constant 0 : i32
    %c0_i32_1 = arith.constant 0 : i32
    return %c0_i32, %c0_i32_0 : i32, i32
  }
}

</mosaic_0001>

<llo_original>
// kernel: tile.18
$region0: #{tile.18}
  #allocation0 [shape = 's32[1]{0}', space=sflag, size = 0x4, scoped, tag = 'scoped memory for tile.18']
  %s0 = inlined_call_operand.vmem [shape: f32[4], index: 0, kind: input, shape index: {}]
  %s1 = inlined_call_operand.vmem [shape: f32[2,1,1,4], index: 1, kind: output, shape index: {}]
  // Predicated region
  $region2: #{tile.18} parent=0 // pred_check
    _
  $region3: #{tile.18} parent=0 // pred_check_branch
    %3 = sbr.rel (0) target = $region5
  $region4: #{tile.18} parent=0 // pred_region
    _
  $region5: #{tile.18} parent=0 // pred_fallthru
    _
  %v4 = vld [vmem:[%s0] ss:$0 sm:$0xff]
  %5 = vst [vmem:[%s1] sm:$0x3] %v4

// kernel: tile.0
$region0: #{tile.0}
  %s0 = inlined_call_operand.vmem [shape: f32[2,1,1,4], index: 0, kind: input, shape index: {}]
  %s1 = inlined_call_operand.vmem [shape: f32[8,1], index: 1, kind: output, shape index: {}]
  $region1: #{tile.0} parent=0
    #allocation0 [shape = 'u8[4096]{0}', space=vmem, size = 0x1000, scoped, tag = 'scoped mem for input reshape']
    %s3 = sshllo.u32 0, 2
    %v4 = vld [vmem:[%s0] sm:%s3]
    %5 = vst [vmem:[#allocation0] sm:%s3] %v4
    %v6 = vld [vmem:[#allocation0] sm:$0x3]
    %vm7 = vcmask 7168
    %8 = vst.msk [vmem:[%s1] ss:$4 sm:$0x3] %vm7, %v6
    %v9 = vld [vmem:[#allocation0] sm:$0x3]
    %10 = vrot.lane.b32.xlu0 %v9, 127
    %v11 = vpop.permute.xlu0 %10
    %vm12 = vcmask 7168
    %s13 = scalar_lea.vmem %s1, 1
    %14 = vst.msk [vmem:[%s13] ss:$4 sm:$0x3] %vm12, %v11
    %v15 = vld [vmem:[#allocation0] sm:$0x3]
    %16 = vrot.lane.b32.xlu0 %v15, 126
    %v17 = vpop.permute.xlu0 %16
    %vm18 = vcmask 7168
    %s19 = scalar_lea.vmem %s1, 2
    %20 = vst.msk [vmem:[%s19] ss:$4 sm:$0x3] %vm18, %v17
    %v21 = vld [vmem:[#allocation0] sm:$0x3]
    %22 = vrot.lane.b32.xlu0 %v21, 125
    %v23 = vpop.permute.xlu0 %22
    %vm24 = vcmask 7168
    %s25 = scalar_lea.vmem %s1, 3
    %26 = vst.msk [vmem:[%s25] ss:$4 sm:$0x3] %vm24, %v23

// kernel: basic_block_forward.1
$region0: #{basic_block_forward.1}
  #allocation0 [shape = 'u32[]', space=smem, size = 0x4, offset = 0x4, fixed_abs, tag = 'smem constant byte address 0x4 - core index']
  #allocation1 [shape = 'u32[144,128]{1,0:T(1,128)}', space=vmem, size = 0x12000, scoped, tag = 'internal scratch']
  %s0 = inlined_call_operand.vmem [shape: f32[8,256], index: 0, kind: input, shape index: {}]
  %s1 = inlined_call_operand.vmem [shape: f32[9,8,256], index: 1, kind: input, shape index: {}]
  %s2 = inlined_call_operand.vmem [shape: f32[9,8,8], index: 2, kind: input, shape index: {}]
  %s3 = inlined_call_operand.vmem [shape: f32[9,8,8], index: 3, kind: input, shape index: {}]
  %s4 = inlined_call_operand.vmem [shape: f32[8,1], index: 4, kind: input, shape index: {}]
  %s5 = inlined_call_operand.vmem [shape: f32[8,1], index: 5, kind: input, shape index: {}]
  %s6 = inlined_call_operand.vmem [shape: f32[8,1], index: 6, kind: input, shape index: {}]
  %s7 = inlined_call_operand.vmem [shape: f32[8,1], index: 7, kind: input, shape index: {}]
  %s8 = inlined_call_operand.vmem [shape: f32[8,256], index: 8, kind: output, shape index: {}]
  %s9 = sld [smem:[#allocation0]]
  $region42: #{basic_block_forward.1} parent=0
    _
  %s11 = ssub.s32 1, %s9
  %s12 = scalar_select 0, %s11, %s9
  // Predicated region
  $region2: #{basic_block_forward.1} parent=0 // pred_check
    _
  $region3: #{basic_block_forward.1} parent=0 // pred_check_branch
    %14 = sbr.rel (0) target = $region5
  $region4: #{basic_block_forward.1} parent=0 // pred_region
    _
  $region5: #{basic_block_forward.1} parent=0 // pred_fallthru
    _
  // Predicated region
  $region6: #{basic_block_forward.1} parent=0 // pred_check
    _
  $region7: #{basic_block_forward.1} parent=0 // pred_check_branch
    %16 = sbr.rel (0) target = $region9
  $region8: #{basic_block_forward.1} parent=0 // pred_region
    _
  $region9: #{basic_block_forward.1} parent=0 // pred_fallthru
    _
  // Predicated region
  $region10: #{basic_block_forward.1} parent=0 // pred_check
    _
  $region11: #{basic_block_forward.1} parent=0 // pred_check_branch
    %18 = sbr.rel (0) target = $region13
  $region12: #{basic_block_forward.1} parent=0 // pred_region
    _
  $region13: #{basic_block_forward.1} parent=0 // pred_fallthru
    _
  // Predicated region
  $region14: #{basic_block_forward.1} parent=0 // pred_check
    _
  $region15: #{basic_block_forward.1} parent=0 // pred_check_branch
    %20 = sbr.rel (0) target = $region17
  $region16: #{basic_block_forward.1} parent=0 // pred_region
    _
  $region17: #{basic_block_forward.1} parent=0 // pred_fallthru
    _
  // Predicated region
  $region18: #{basic_block_forward.1} parent=0 // pred_check
    _
  $region19: #{basic_block_forward.1} parent=0 // pred_check_branch
    %22 = sbr.rel (0) target = $region21
  $region20: #{basic_block_forward.1} parent=0 // pred_region
    _
  $region21: #{basic_block_forward.1} parent=0 // pred_fallthru
    _
  // Predicated region
  $region22: #{basic_block_forward.1} parent=0 // pred_check
    _
  $region23: #{basic_block_forward.1} parent=0 // pred_check_branch
    %24 = sbr.rel (0) target = $region25
  $region24: #{basic_block_forward.1} parent=0 // pred_region
    _
  $region25: #{basic_block_forward.1} parent=0 // pred_fallthru
    _
  // Predicated region
  $region26: #{basic_block_forward.1} parent=0 // pred_check
    _
  $region27: #{basic_block_forward.1} parent=0 // pred_check_branch
    %26 = sbr.rel (0) target = $region29
  $region28: #{basic_block_forward.1} parent=0 // pred_region
    _
  $region29: #{basic_block_forward.1} parent=0 // pred_fallthru
    _
  // Predicated region
  $region30: #{basic_block_forward.1} parent=0 // pred_check
    _
  $region31: #{basic_block_forward.1} parent=0 // pred_check_branch
    %28 = sbr.rel (0) target = $region33
  $region32: #{basic_block_forward.1} parent=0 // pred_region
    _
  $region33: #{basic_block_forward.1} parent=0 // pred_fallthru
    _
  %v29 = vld [vmem:[%s0] sm:$0xff]
  %v30 = vld [vmem:[%s0 + $0x8] sm:$0xff]
  %v31 = vld [vmem:[%s1] sm:$0xff]
  %v32 = vld [vmem:[%s1 + $0x8] sm:$0xff]
  %33 = vrot.lane.b32.xlu0 %v29, 17
  %v34 = vpop.permute.xlu0 %33
  %35 = vrot.lane.b32.xlu0 %v30, 17
  %v36 = vpop.permute.xlu0 %35
  %v37 = vlaneseq
  %v38 = vand.u32 %v37, 127
  %vm39 = vcmp.lt.s32.totalorder %v38, 17
  %v40 = vsel %vm39, %v34, %v36
  %v41 = vsel %vm39, %v36, %v34
  %v42 = vmul.f32 %v31, %v41
  %v43 = vmul.f32 %v32, %v40
  %v44 = vld [vmem:[%s2] sm:$0xff]
  %46 = vset.pattern.permute.xlu0 0
  %47 = vperm.xlu0 %46, %v44
  %v48 = vpop.permute.xlu0 %47
  %v50 = vmul.f32 %v48, %v42
  %v51 = vmul.f32 %v48, %v43
  %v52 = vadd.f32 %v50, 0.0
  %v53 = vadd.f32 %v51, 0.0
  %v54 = vrot.slane %v42, 7
  %v55 = vrot.slane %v43, 7
  %56 = vset.pattern.permute.xlu0 1
  %57 = vperm.xlu0 %56, %v44
  %v58 = vpop.permute.xlu0 %57
  %v60 = vmul.f32 %v58, %v54
  %v61 = vmul.f32 %v58, %v55
  %v62 = vadd.f32 %v52, %v60
  %v63 = vadd.f32 %v53, %v61
  %v64 = vrot.slane %v42, 6
  %v65 = vrot.slane %v43, 6
  %66 = vset.pattern.permute.xlu0 2
  %67 = vperm.xlu0 %66, %v44
  %v68 = vpop.permute.xlu0 %67
  %v70 = vmul.f32 %v68, %v64
  %v71 = vmul.f32 %v68, %v65
  %v72 = vadd.f32 %v62, %v70
  %v73 = vadd.f32 %v63, %v71
  %v74 = vrot.slane %v42, 5
  %v75 = vrot.slane %v43, 5
  %76 = vset.pattern.permute.xlu0 3
  %77 = vperm.xlu0 %76, %v44
  %v78 = vpop.permute.xlu0 %77
  %v80 = vmul.f32 %v78, %v74
  %v81 = vmul.f32 %v78, %v75
  %v82 = vadd.f32 %v72, %v80
  %v83 = vadd.f32 %v73, %v81
  %v84 = vrot.slane %v42, 3
  %v85 = vrot.slane %v43, 3
  %86 = vset.pattern.permute.xlu0 5
  %87 = vperm.xlu0 %86, %v44
  %v88 = vpop.permute.xlu0 %87
  %v90 = vmul.f32 %v88, %v84
  %v91 = vmul.f32 %v88, %v85
  %v92 = vadd.f32 %v82, %v90
  %v93 = vadd.f32 %v83, %v91
  %v94 = vrot.slane %v42, 2
  %v95 = vrot.slane %v43, 2
  %96 = vset.pattern.permute.xlu0 6
  %97 = vperm.xlu0 %96, %v44
  %v98 = vpop.permute.xlu0 %97
  %v100 = vmul.f32 %v98, %v94
  %v101 = vmul.f32 %v98, %v95
  %v102 = vadd.f32 %v92, %v100
  %v103 = vadd.f32 %v93, %v101
  %v104 = vrot.slane %v42, 1
  %v105 = vrot.slane %v43, 1
  %106 = vset.pattern.permute.xlu0 7
  %107 = vperm.xlu0 %106, %v44
  %v108 = vpop.permute.xlu0 %107
  %v110 = vmul.f32 %v108, %v104
  %v111 = vmul.f32 %v108, %v105
  %v112 = vadd.f32 %v102, %v110
  %v113 = vadd.f32 %v103, %v111
  %s114 = scalar_lea.vmem %s1, 16
  %v115 = vld [vmem:[%s114] sm:$0xff]
  %v116 = vld [vmem:[%s114 + $0x8] sm:$0xff]
  %117 = vrot.lane.b32.xlu0 %v29, 16
  %v118 = vpop.permute.xlu0 %117
  %119 = vrot.lane.b32.xlu0 %v30, 16
  %v120 = vpop.permute.xlu0 %119
  %vm121 = vcmp.lt.s32.totalorder %v38, 16
  %v122 = vsel %vm121, %v118, %v120
  %v123 = vsel %vm121, %v120, %v118
  %v124 = vmul.f32 %v115, %v123
  %v125 = vmul.f32 %v116, %v122
  %s126 = scalar_lea.vmem %s2, 8
  %v127 = vld [vmem:[%s126] sm:$0xff]
  %129 = vset.pattern.permute.xlu0 0
  %130 = vperm.xlu0 %129, %v127
  %v131 = vpop.permute.xlu0 %130
  %v133 = vmul.f32 %v131, %v124
  %v134 = vmul.f32 %v131, %v125
  %v135 = vadd.f32 %v112, %v133
  %v136 = vadd.f32 %v113, %v134
  %v137 = vrot.slane %v124, 7
  %v138 = vrot.slane %v125, 7
  %139 = vset.pattern.permute.xlu0 1
  %140 = vperm.xlu0 %139, %v127
  %v141 = vpop.permute.xlu0 %140
  %v143 = vmul.f32 %v141, %v137
  %v144 = vmul.f32 %v141, %v138
  %v145 = vadd.f32 %v135, %v143
  %v146 = vadd.f32 %v136, %v144
  %v147 = vrot.slane %v124, 6
  %v148 = vrot.slane %v125, 6
  %149 = vset.pattern.permute.xlu0 2
  %150 = vperm.xlu0 %149, %v127
  %v151 = vpop.permute.xlu0 %150
  %v153 = vmul.f32 %v151, %v147
  %v154 = vmul.f32 %v151, %v148
  %v155 = vadd.f32 %v145, %v153
  %v156 = vadd.f32 %v146, %v154
  %v157 = vrot.slane %v124, 5
  %v158 = vrot.slane %v125, 5
  %159 = vset.pattern.permute.xlu0 3
  %160 = vperm.xlu0 %159, %v127
  %v161 = vpop.permute.xlu0 %160
  %v163 = vmul.f32 %v161, %v157
  %v164 = vmul.f32 %v161, %v158
  %v165 = vadd.f32 %v155, %v163
  %v166 = vadd.f32 %v156, %v164
  %v167 = vrot.slane %v124, 3
  %v168 = vrot.slane %v125, 3
  %169 = vset.pattern.permute.xlu0 5
  %170 = vperm.xlu0 %169, %v127
  %v171 = vpop.permute.xlu0 %170
  %v173 = vmul.f32 %v171, %v167
  %v174 = vmul.f32 %v171, %v168
  %v175 = vadd.f32 %v165, %v173
  %v176 = vadd.f32 %v166, %v174
  %v177 = vrot.slane %v124, 2
  %v178 = vrot.slane %v125, 2
  %179 = vset.pattern.permute.xlu0 6
  %180 = vperm.xlu0 %179, %v127
  %v181 = vpop.permute.xlu0 %180
  %v183 = vmul.f32 %v181, %v177
  %v184 = vmul.f32 %v181, %v178
  %v185 = vadd.f32 %v175, %v183
  %v186 = vadd.f32 %v176, %v184
  %v187 = vrot.slane %v124, 1
  %v188 = vrot.slane %v125, 1
  %189 = vset.pattern.permute.xlu0 7
  %190 = vperm.xlu0 %189, %v127
  %v191 = vpop.permute.xlu0 %190
  %v193 = vmul.f32 %v191, %v187
  %v194 = vmul.f32 %v191, %v188
  %v195 = vadd.f32 %v185, %v193
  %v196 = vadd.f32 %v186, %v194
  %s197 = scalar_lea.vmem %s1, 32
  %v198 = vld [vmem:[%s197] sm:$0xff]
  %v199 = vld [vmem:[%s197 + $0x8] sm:$0xff]
  %200 = vrot.lane.b32.xlu0 %v29, 15
  %v201 = vpop.permute.xlu0 %200
  %202 = vrot.lane.b32.xlu0 %v30, 15
  %v203 = vpop.permute.xlu0 %202
  %vm204 = vcmp.lt.s32.totalorder %v38, 15
  %v205 = vsel %vm204, %v201, %v203
  %v206 = vsel %vm204, %v203, %v201
  %v207 = vmul.f32 %v198, %v206
  %v208 = vmul.f32 %v199, %v205
  %s209 = scalar_lea.vmem %s2, 16
  %v210 = vld [vmem:[%s209] sm:$0xff]
  %212 = vset.pattern.permute.xlu0 0
  %213 = vperm.xlu0 %212, %v210
  %v214 = vpop.permute.xlu0 %213
  %v216 = vmul.f32 %v214, %v207
  %v217 = vmul.f32 %v214, %v208
  %v218 = vadd.f32 %v195, %v216
  %v219 = vadd.f32 %v196, %v217
  %v220 = vrot.slane %v207, 7
  %v221 = vrot.slane %v208, 7
  %222 = vset.pattern.permute.xlu0 1
  %223 = vperm.xlu0 %222, %v210
  %v224 = vpop.permute.xlu0 %223
  %v226 = vmul.f32 %v224, %v220
  %v227 = vmul.f32 %v224, %v221
  %v228 = vadd.f32 %v218, %v226
  %v229 = vadd.f32 %v219, %v227
  %v230 = vrot.slane %v207, 6
  %v231 = vrot.slane %v208, 6
  %232 = vset.pattern.permute.xlu0 2
  %233 = vperm.xlu0 %232, %v210
  %v234 = vpop.permute.xlu0 %233
  %v236 = vmul.f32 %v234, %v230
  %v237 = vmul.f32 %v234, %v231
  %v238 = vadd.f32 %v228, %v236
  %v239 = vadd.f32 %v229, %v237
  %v240 = vrot.slane %v207, 5
  %v241 = vrot.slane %v208, 5
  %242 = vset.pattern.permute.xlu0 3
  %243 = vperm.xlu0 %242, %v210
  %v244 = vpop.permute.xlu0 %243
  %v246 = vmul.f32 %v244, %v240
  %v247 = vmul.f32 %v244, %v241
  %v248 = vadd.f32 %v238, %v246
  %v249 = vadd.f32 %v239, %v247
  %v250 = vrot.slane %v207, 3
  %v251 = vrot.slane %v208, 3
  %252 = vset.pattern.permute.xlu0 5
  %253 = vperm.xlu0 %252, %v210
  %v254 = vpop.permute.xlu0 %253
  %v256 = vmul.f32 %v254, %v250
  %v257 = vmul.f32 %v254, %v251
  %v258 = vadd.f32 %v248, %v256
  %v259 = vadd.f32 %v249, %v257
  %v260 = vrot.slane %v207, 2
  %v261 = vrot.slane %v208, 2
  %262 = vset.pattern.permute.xlu0 6
  %263 = vperm.xlu0 %262, %v210
  %v264 = vpop.permute.xlu0 %263
  %v266 = vmul.f32 %v264, %v260
  %v267 = vmul.f32 %v264, %v261
  %v268 = vadd.f32 %v258, %v266
  %v269 = vadd.f32 %v259, %v267
  %v270 = vrot.slane %v207, 1
  %v271 = vrot.slane %v208, 1
  %272 = vset.pattern.permute.xlu0 7
  %273 = vperm.xlu0 %272, %v210
  %v274 = vpop.permute.xlu0 %273
  %v276 = vmul.f32 %v274, %v270
  %v277 = vmul.f32 %v274, %v271
  %v278 = vadd.f32 %v268, %v276
  %v279 = vadd.f32 %v269, %v277
  %s280 = scalar_lea.vmem %s1, 48
  %v281 = vld [vmem:[%s280] sm:$0xff]
  %v282 = vld [vmem:[%s280 + $0x8] sm:$0xff]
  %283 = vrot.lane.b32.xlu0 %v29, 1
  %v284 = vpop.permute.xlu0 %283
  %285 = vrot.lane.b32.xlu0 %v30, 1
  %v286 = vpop.permute.xlu0 %285
  %vm287 = vcmp.lt.s32.totalorder %v38, 1
  %v288 = vsel %vm287, %v284, %v286
  %v289 = vsel %vm287, %v286, %v284
  %v290 = vmul.f32 %v281, %v289
  %v291 = vmul.f32 %v282, %v288
  %s292 = scalar_lea.vmem %s2, 24
  %v293 = vld [vmem:[%s292] sm:$0xff]
  %295 = vset.pattern.permute.xlu0 0
  %296 = vperm.xlu0 %295, %v293
  %v297 = vpop.permute.xlu0 %296
  %v299 = vmul.f32 %v297, %v290
  %v300 = vmul.f32 %v297, %v291
  %v301 = vadd.f32 %v278, %v299
  %v302 = vadd.f32 %v279, %v300
  %v303 = vrot.slane %v290, 7
  %v304 = vrot.slane %v291, 7
  %305 = vset.pattern.permute.xlu0 1
  %306 = vperm.xlu0 %305, %v293
  %v307 = vpop.permute.xlu0 %306
  %v309 = vmul.f32 %v307, %v303
  %v310 = vmul.f32 %v307, %v304
  %v311 = vadd.f32 %v301, %v309
  %v312 = vadd.f32 %v302, %v310
  %v313 = vrot.slane %v290, 6
  %v314 = vrot.slane %v291, 6
  %315 = vset.pattern.permute.xlu0 2
  %316 = vperm.xlu0 %315, %v293
  %v317 = vpop.permute.xlu0 %316
  %v319 = vmul.f32 %v317, %v313
  %v320 = vmul.f32 %v317, %v314
  %v321 = vadd.f32 %v311, %v319
  %v322 = vadd.f32 %v312, %v320
  %v323 = vrot.slane %v290, 5
  %v324 = vrot.slane %v291, 5
  %325 = vset.pattern.permute.xlu0 3
  %326 = vperm.xlu0 %325, %v293
  %v327 = vpop.permute.xlu0 %326
  %v329 = vmul.f32 %v327, %v323
  %v330 = vmul.f32 %v327, %v324
  %v331 = vadd.f32 %v321, %v329
  %v332 = vadd.f32 %v322, %v330
  %v333 = vrot.slane %v290, 3
  %v334 = vrot.slane %v291, 3
  %335 = vset.pattern.permute.xlu0 5
  %336 = vperm.xlu0 %335, %v293
  %v337 = vpop.permute.xlu0 %336
  %v339 = vmul.f32 %v337, %v333
  %v340 = vmul.f32 %v337, %v334
  %v341 = vadd.f32 %v331, %v339
  %v342 = vadd.f32 %v332, %v340
  %v343 = vrot.slane %v290, 2
  %v344 = vrot.slane %v291, 2
  %345 = vset.pattern.permute.xlu0 6
  %346 = vperm.xlu0 %345, %v293
  %v347 = vpop.permute.xlu0 %346
  %v349 = vmul.f32 %v347, %v343
  %v350 = vmul.f32 %v347, %v344
  %v351 = vadd.f32 %v341, %v349
  %v352 = vadd.f32 %v342, %v350
  %v353 = vrot.slane %v290, 1
  %v354 = vrot.slane %v291, 1
  %355 = vset.pattern.permute.xlu0 7
  %356 = vperm.xlu0 %355, %v293
  %v357 = vpop.permute.xlu0 %356
  %v359 = vmul.f32 %v357, %v353
  %v360 = vmul.f32 %v357, %v354
  %v361 = vadd.f32 %v351, %v359
  %v362 = vadd.f32 %v352, %v360
  %s363 = scalar_lea.vmem %s2, 32
  %v364 = vld [vmem:[%s363] sm:$0xff]
  %366 = vset.pattern.permute.xlu0 0
  %367 = vperm.xlu0 %366, %v364
  %v368 = vpop.permute.xlu0 %367
  %v370 = vmul.f32 %v368, %v29
  %v371 = vmul.f32 %v368, %v30
  %v372 = vadd.f32 %v361, %v370
  %v373 = vadd.f32 %v362, %v371
  %v374 = vrot.slane %v29, 7
  %v375 = vrot.slane %v30, 7
  %376 = vset.pattern.permute.xlu0 1
  %377 = vperm.xlu0 %376, %v364
  %v378 = vpop.permute.xlu0 %377
  %v380 = vmul.f32 %v378, %v374
  %v381 = vmul.f32 %v378, %v375
  %v382 = vadd.f32 %v372, %v380
  %v383 = vadd.f32 %v373, %v381
  %v384 = vrot.slane %v29, 6
  %v385 = vrot.slane %v30, 6
  %386 = vset.pattern.permute.xlu0 2
  %387 = vperm.xlu0 %386, %v364
  %v388 = vpop.permute.xlu0 %387
  %v390 = vmul.f32 %v388, %v384
  %v391 = vmul.f32 %v388, %v385
  %v392 = vadd.f32 %v382, %v390
  %v393 = vadd.f32 %v383, %v391
  %v394 = vrot.slane %v29, 5
  %v395 = vrot.slane %v30, 5
  %396 = vset.pattern.permute.xlu0 3
  %397 = vperm.xlu0 %396, %v364
  %v398 = vpop.permute.xlu0 %397
  %v400 = vmul.f32 %v398, %v394
  %v401 = vmul.f32 %v398, %v395
  %v402 = vadd.f32 %v392, %v400
  %v403 = vadd.f32 %v393, %v401
  %v404 = vrot.slane %v29, 3
  %v405 = vrot.slane %v30, 3
  %406 = vset.pattern.permute.xlu0 5
  %407 = vperm.xlu0 %406, %v364
  %v408 = vpop.permute.xlu0 %407
  %v410 = vmul.f32 %v408, %v404
  %v411 = vmul.f32 %v408, %v405
  %v412 = vadd.f32 %v402, %v410
  %v413 = vadd.f32 %v403, %v411
  %v414 = vrot.slane %v29, 2
  %v415 = vrot.slane %v30, 2
  %416 = vset.pattern.permute.xlu0 6
  %417 = vperm.xlu0 %416, %v364
  %v418 = vpop.permute.xlu0 %417
  %v420 = vmul.f32 %v418, %v414
  %v421 = vmul.f32 %v418, %v415
  %v422 = vadd.f32 %v412, %v420
  %v423 = vadd.f32 %v413, %v421
  %v424 = vrot.slane %v29, 1
  %v425 = vrot.slane %v30, 1
  %426 = vset.pattern.permute.xlu0 7
  %427 = vperm.xlu0 %426, %v364
  %v428 = vpop.permute.xlu0 %427
  %v430 = vmul.f32 %v428, %v424
  %v431 = vmul.f32 %v428, %v425
  %v432 = vadd.f32 %v422, %v430
  %v433 = vadd.f32 %v423, %v431
  %s434 = scalar_lea.vmem %s1, 80
  %v435 = vld [vmem:[%s434] sm:$0xff]
  %v436 = vld [vmem:[%s434 + $0x8] sm:$0xff]
  %437 = vrot.lane.b32.xlu0 %v29, 127
  %v438 = vpop.permute.xlu0 %437
  %439 = vrot.lane.b32.xlu0 %v30, 127
  %v440 = vpop.permute.xlu0 %439
  %vm441 = vcmp.lt.s32.totalorder %v38, 127
  %v442 = vsel %vm441, %v438, %v440
  %v443 = vsel %vm441, %v440, %v438
  %v444 = vmul.f32 %v435, %v442
  %v445 = vmul.f32 %v436, %v443
  %s446 = scalar_lea.vmem %s2, 40
  %v447 = vld [vmem:[%s446] sm:$0xff]
  %449 = vset.pattern.permute.xlu0 0
  %450 = vperm.xlu0 %449, %v447
  %v451 = vpop.permute.xlu0 %450
  %v453 = vmul.f32 %v451, %v444
  %v454 = vmul.f32 %v451, %v445
  %v455 = vadd.f32 %v432, %v453
  %v456 = vadd.f32 %v433, %v454
  %v457 = vrot.slane %v444, 7
  %v458 = vrot.slane %v445, 7
  %459 = vset.pattern.permute.xlu0 1
  %460 = vperm.xlu0 %459, %v447
  %v461 = vpop.permute.xlu0 %460
  %v463 = vmul.f32 %v461, %v457
  %v464 = vmul.f32 %v461, %v458
  %v465 = vadd.f32 %v455, %v463
  %v466 = vadd.f32 %v456, %v464
  %v467 = vrot.slane %v444, 6
  %v468 = vrot.slane %v445, 6
  %469 = vset.pattern.permute.xlu0 2
  %470 = vperm.xlu0 %469, %v447
  %v471 = vpop.permute.xlu0 %470
  %v473 = vmul.f32 %v471, %v467
  %v474 = vmul.f32 %v471, %v468
  %v475 = vadd.f32 %v465, %v473
  %v476 = vadd.f32 %v466, %v474
  %v477 = vrot.slane %v444, 5
  %v478 = vrot.slane %v445, 5
  %479 = vset.pattern.permute.xlu0 3
  %480 = vperm.xlu0 %479, %v447
  %v481 = vpop.permute.xlu0 %480
  %v483 = vmul.f32 %v481, %v477
  %v484 = vmul.f32 %v481, %v478
  %v485 = vadd.f32 %v475, %v483
  %v486 = vadd.f32 %v476, %v484
  %v487 = vrot.slane %v444, 3
  %v488 = vrot.slane %v445, 3
  %489 = vset.pattern.permute.xlu0 5
  %490 = vperm.xlu0 %489, %v447
  %v491 = vpop.permute.xlu0 %490
  %v493 = vmul.f32 %v491, %v487
  %v494 = vmul.f32 %v491, %v488
  %v495 = vadd.f32 %v485, %v493
  %v496 = vadd.f32 %v486, %v494
  %v497 = vrot.slane %v444, 2
  %v498 = vrot.slane %v445, 2
  %499 = vset.pattern.permute.xlu0 6
  %500 = vperm.xlu0 %499, %v447
  %v501 = vpop.permute.xlu0 %500
  %v503 = vmul.f32 %v501, %v497
  %v504 = vmul.f32 %v501, %v498
  %v505 = vadd.f32 %v495, %v503
  %v506 = vadd.f32 %v496, %v504
  %v507 = vrot.slane %v444, 1
  %v508 = vrot.slane %v445, 1
  %509 = vset.pattern.permute.xlu0 7
  %510 = vperm.xlu0 %509, %v447
  %v511 = vpop.permute.xlu0 %510
  %v513 = vmul.f32 %v511, %v507
  %v514 = vmul.f32 %v511, %v508
  %v515 = vadd.f32 %v505, %v513
  %v516 = vadd.f32 %v506, %v514
  %s517 = scalar_lea.vmem %s1, 96
  %v518 = vld [vmem:[%s517] sm:$0xff]
  %v519 = vld [vmem:[%s517 + $0x8] sm:$0xff]
  %520 = vrot.lane.b32.xlu0 %v29, 113
  %v521 = vpop.permute.xlu0 %520
  %522 = vrot.lane.b32.xlu0 %v30, 113
  %v523 = vpop.permute.xlu0 %522
  %vm524 = vcmp.lt.s32.totalorder %v38, 113
  %v525 = vsel %vm524, %v521, %v523
  %v526 = vsel %vm524, %v523, %v521
  %v527 = vmul.f32 %v518, %v525
  %v528 = vmul.f32 %v519, %v526
  %s529 = scalar_lea.vmem %s2, 48
  %v530 = vld [vmem:[%s529] sm:$0xff]
  %532 = vset.pattern.permute.xlu0 0
  %533 = vperm.xlu0 %532, %v530
  %v534 = vpop.permute.xlu0 %533
  %v536 = vmul.f32 %v534, %v527
  %v537 = vmul.f32 %v534, %v528
  %v538 = vadd.f32 %v515, %v536
  %v539 = vadd.f32 %v516, %v537
  %v540 = vrot.slane %v527, 7
  %v541 = vrot.slane %v528, 7
  %542 = vset.pattern.permute.xlu0 1
  %543 = vperm.xlu0 %542, %v530
  %v544 = vpop.permute.xlu0 %543
  %v546 = vmul.f32 %v544, %v540
  %v547 = vmul.f32 %v544, %v541
  %v548 = vadd.f32 %v538, %v546
  %v549 = vadd.f32 %v539, %v547
  %v550 = vrot.slane %v527, 6
  %v551 = vrot.slane %v528, 6
  %552 = vset.pattern.permute.xlu0 2
  %553 = vperm.xlu0 %552, %v530
  %v554 = vpop.permute.xlu0 %553
  %v556 = vmul.f32 %v554, %v550
  %v557 = vmul.f32 %v554, %v551
  %v558 = vadd.f32 %v548, %v556
  %v559 = vadd.f32 %v549, %v557
  %v560 = vrot.slane %v527, 5
  %v561 = vrot.slane %v528, 5
  %562 = vset.pattern.permute.xlu0 3
  %563 = vperm.xlu0 %562, %v530
  %v564 = vpop.permute.xlu0 %563
  %v566 = vmul.f32 %v564, %v560
  %v567 = vmul.f32 %v564, %v561
  %v568 = vadd.f32 %v558, %v566
  %v569 = vadd.f32 %v559, %v567
  %v570 = vrot.slane %v527, 3
  %v571 = vrot.slane %v528, 3
  %572 = vset.pattern.permute.xlu0 5
  %573 = vperm.xlu0 %572, %v530
  %v574 = vpop.permute.xlu0 %573
  %v576 = vmul.f32 %v574, %v570
  %v577 = vmul.f32 %v574, %v571
  %v578 = vadd.f32 %v568, %v576
  %v579 = vadd.f32 %v569, %v577
  %v580 = vrot.slane %v527, 2
  %v581 = vrot.slane %v528, 2
  %582 = vset.pattern.permute.xlu0 6
  %583 = vperm.xlu0 %582, %v530
  %v584 = vpop.permute.xlu0 %583
  %v586 = vmul.f32 %v584, %v580
  %v587 = vmul.f32 %v584, %v581
  %v588 = vadd.f32 %v578, %v586
  %v589 = vadd.f32 %v579, %v587
  %v590 = vrot.slane %v527, 1
  %v591 = vrot.slane %v528, 1
  %592 = vset.pattern.permute.xlu0 7
  %593 = vperm.xlu0 %592, %v530
  %v594 = vpop.permute.xlu0 %593
  %v596 = vmul.f32 %v594, %v590
  %v597 = vmul.f32 %v594, %v591
  %v598 = vadd.f32 %v588, %v596
  %v599 = vadd.f32 %v589, %v597
  %s600 = scalar_lea.vmem %s1, 112
  %v601 = vld [vmem:[%s600] sm:$0xff]
  %v602 = vld [vmem:[%s600 + $0x8] sm:$0xff]
  %603 = vrot.lane.b32.xlu0 %v29, 112
  %v604 = vpop.permute.xlu0 %603
  %605 = vrot.lane.b32.xlu0 %v30, 112
  %v606 = vpop.permute.xlu0 %605
  %vm607 = vcmp.lt.s32.totalorder %v38, 112
  %v608 = vsel %vm607, %v604, %v606
  %v609 = vsel %vm607, %v606, %v604
  %v610 = vmul.f32 %v601, %v608
  %v611 = vmul.f32 %v602, %v609
  %s612 = scalar_lea.vmem %s2, 56
  %v613 = vld [vmem:[%s612] sm:$0xff]
  %615 = vset.pattern.permute.xlu0 0
  %616 = vperm.xlu0 %615, %v613
  %v617 = vpop.permute.xlu0 %616
  %v619 = vmul.f32 %v617, %v610
  %v620 = vmul.f32 %v617, %v611
  %v621 = vadd.f32 %v598, %v619
  %v622 = vadd.f32 %v599, %v620
  %v623 = vrot.slane %v610, 7
  %v624 = vrot.slane %v611, 7
  %625 = vset.pattern.permute.xlu0 1
  %626 = vperm.xlu0 %625, %v613
  %v627 = vpop.permute.xlu0 %626
  %v629 = vmul.f32 %v627, %v623
  %v630 = vmul.f32 %v627, %v624
  %v631 = vadd.f32 %v621, %v629
  %v632 = vadd.f32 %v622, %v630
  %v633 = vrot.slane %v610, 6
  %v634 = vrot.slane %v611, 6
  %635 = vset.pattern.permute.xlu0 2
  %636 = vperm.xlu0 %635, %v613
  %v637 = vpop.permute.xlu0 %636
  %v639 = vmul.f32 %v637, %v633
  %v640 = vmul.f32 %v637, %v634
  %v641 = vadd.f32 %v631, %v639
  %v642 = vadd.f32 %v632, %v640
  %v643 = vrot.slane %v610, 5
  %v644 = vrot.slane %v611, 5
  %645 = vset.pattern.permute.xlu0 3
  %646 = vperm.xlu0 %645, %v613
  %v647 = vpop.permute.xlu0 %646
  %v649 = vmul.f32 %v647, %v643
  %v650 = vmul.f32 %v647, %v644
  %v651 = vadd.f32 %v641, %v649
  %v652 = vadd.f32 %v642, %v650
  %v653 = vrot.slane %v610, 3
  %v654 = vrot.slane %v611, 3
  %655 = vset.pattern.permute.xlu0 5
  %656 = vperm.xlu0 %655, %v613
  %v657 = vpop.permute.xlu0 %656
  %v659 = vmul.f32 %v657, %v653
  %v660 = vmul.f32 %v657, %v654
  %v661 = vadd.f32 %v651, %v659
  %v662 = vadd.f32 %v652, %v660
  %v663 = vrot.slane %v610, 2
  %v664 = vrot.slane %v611, 2
  %665 = vset.pattern.permute.xlu0 6
  %666 = vperm.xlu0 %665, %v613
  %v667 = vpop.permute.xlu0 %666
  %v669 = vmul.f32 %v667, %v663
  %v670 = vmul.f32 %v667, %v664
  %v671 = vadd.f32 %v661, %v669
  %v672 = vadd.f32 %v662, %v670
  %v673 = vrot.slane %v610, 1
  %v674 = vrot.slane %v611, 1
  %675 = vset.pattern.permute.xlu0 7
  %676 = vperm.xlu0 %675, %v613
  %v677 = vpop.permute.xlu0 %676
  %v679 = vmul.f32 %v677, %v673
  %v680 = vmul.f32 %v677, %v674
  %v681 = vadd.f32 %v671, %v679
  %v682 = vadd.f32 %v672, %v680
  %s683 = scalar_lea.vmem %s1, 128
  %v684 = vld [vmem:[%s683] sm:$0xff]
  %v685 = vld [vmem:[%s683 + $0x8] sm:$0xff]
  %686 = vrot.lane.b32.xlu0 %v29, 111
  %v687 = vpop.permute.xlu0 %686
  %688 = vrot.lane.b32.xlu0 %v30, 111
  %v689 = vpop.permute.xlu0 %688
  %vm690 = vcmp.lt.s32.totalorder %v38, 111
  %v691 = vsel %vm690, %v687, %v689
  %v692 = vsel %vm690, %v689, %v687
  %v693 = vmul.f32 %v684, %v691
  %v694 = vmul.f32 %v685, %v692
  %s695 = scalar_lea.vmem %s2, 64
  %v696 = vld [vmem:[%s695] sm:$0xff]
  %698 = vset.pattern.permute.xlu0 0
  %699 = vperm.xlu0 %698, %v696
  %v700 = vpop.permute.xlu0 %699
  %v702 = vmul.f32 %v700, %v693
  %v703 = vmul.f32 %v700, %v694
  %v704 = vadd.f32 %v681, %v702
  %v705 = vadd.f32 %v682, %v703
  %v706 = vrot.slane %v693, 7
  %v707 = vrot.slane %v694, 7
  %708 = vset.pattern.permute.xlu0 1
  %709 = vperm.xlu0 %708, %v696
  %v710 = vpop.permute.xlu0 %709
  %v712 = vmul.f32 %v710, %v706
  %v713 = vmul.f32 %v710, %v707
  %v714 = vadd.f32 %v704, %v712
  %v715 = vadd.f32 %v705, %v713
  %v716 = vrot.slane %v693, 6
  %v717 = vrot.slane %v694, 6
  %718 = vset.pattern.permute.xlu0 2
  %719 = vperm.xlu0 %718, %v696
  %v720 = vpop.permute.xlu0 %719
  %v722 = vmul.f32 %v720, %v716
  %v723 = vmul.f32 %v720, %v717
  %v724 = vadd.f32 %v714, %v722
  %v725 = vadd.f32 %v715, %v723
  %v726 = vrot.slane %v693, 5
  %v727 = vrot.slane %v694, 5
  %728 = vset.pattern.permute.xlu0 3
  %729 = vperm.xlu0 %728, %v696
  %v730 = vpop.permute.xlu0 %729
  %v732 = vmul.f32 %v730, %v726
  %v733 = vmul.f32 %v730, %v727
  %v734 = vadd.f32 %v724, %v732
  %v735 = vadd.f32 %v725, %v733
  %v736 = vrot.slane %v693, 3
  %v737 = vrot.slane %v694, 3
  %738 = vset.pattern.permute.xlu0 5
  %739 = vperm.xlu0 %738, %v696
  %v740 = vpop.permute.xlu0 %739
  %v742 = vmul.f32 %v740, %v736
  %v743 = vmul.f32 %v740, %v737
  %v744 = vadd.f32 %v734, %v742
  %v745 = vadd.f32 %v735, %v743
  %v746 = vrot.slane %v693, 2
  %v747 = vrot.slane %v694, 2
  %748 = vset.pattern.permute.xlu0 6
  %749 = vperm.xlu0 %748, %v696
  %v750 = vpop.permute.xlu0 %749
  %v752 = vmul.f32 %v750, %v746
  %v753 = vmul.f32 %v750, %v747
  %v754 = vadd.f32 %v744, %v752
  %v755 = vadd.f32 %v745, %v753
  %v756 = vrot.slane %v693, 1
  %v757 = vrot.slane %v694, 1
  %758 = vset.pattern.permute.xlu0 7
  %759 = vperm.xlu0 %758, %v696
  %v760 = vpop.permute.xlu0 %759
  %v762 = vmul.f32 %v760, %v756
  %v763 = vmul.f32 %v760, %v757
  %v764 = vadd.f32 %v754, %v762
  %v765 = vadd.f32 %v755, %v763
  %v766 = vadd.f32 %v764, %v765
  %767 = vadd.xlane.f32.xlu0 %v766
  %v768 = vpop.xlane.xlu0 %767
  %v769 = vmul.f32 %v764, %v764
  %v770 = vmul.f32 %v765, %v765
  %v771 = vadd.f32 %v769, %v770
  %772 = vadd.xlane.f32.xlu0 %v771
  %v773 = vpop.xlane.xlu0 %772
  %v774 = vrot.slane %v768, 4
  %v775 = vadd.f32 %v768, %v774
  %v776 = vrot.slane %v773, 4
  %v777 = vadd.f32 %v773, %v776
  %v778 = vmul.f32 %v775, 0.001953125
  %v779 = vmul.f32 %v777, 0.001953125
  %v780 = vmul.f32 %v778, %v778
  %v781 = vsub.f32 %v779, %v780
  %v782 = vld [vmem:[%s4] sm:$0xff]
  %v783 = vadd.f32 %v781, 1e-05
  %v784 = vrsqrt.pop %v783
  %v785 = vmul.f32 %v782, %v784
  %v786 = vld [vmem:[%s5] sm:$0xff]
  %v787 = vmul.f32 %v778, %v785
  %v788 = vsub.f32 %v786, %v787
  %790 = vset.pattern.permute.xlu0 0
  %791 = vperm.xlu0 %790, %v785
  %v792 = vpop.permute.xlu0 %791
  %v794 = vmul.f32 %v764, %v792
  %v795 = vmul.f32 %v765, %v792
  %797 = vset.pattern.permute.xlu0 0
  %798 = vperm.xlu0 %797, %v788
  %v799 = vpop.permute.xlu0 %798
  %v801 = vadd.f32 %v794, %v799
  %v802 = vadd.f32 %v795, %v799
  %v803 = vmax.f32 %v801, 0.0
  %v804 = vmax.f32 %v802, 0.0
  %805 = vrot.lane.b32.xlu0 %v803, 17
  %v806 = vpop.permute.xlu0 %805
  %807 = vrot.lane.b32.xlu0 %v804, 17
  %v808 = vpop.permute.xlu0 %807
  %v809 = vsel %vm39, %v806, %v808
  %v810 = vsel %vm39, %v808, %v806
  %v811 = vmul.f32 %v31, %v810
  %v812 = vmul.f32 %v32, %v809
  %v813 = vld [vmem:[%s3] sm:$0xff]
  %815 = vset.pattern.permute.xlu0 0
  %816 = vperm.xlu0 %815, %v813
  %v817 = vpop.permute.xlu0 %816
  %v819 = vmul.f32 %v817, %v811
  %v820 = vmul.f32 %v817, %v812
  %v821 = vadd.f32 %v819, 0.0
  %v822 = vadd.f32 %v820, 0.0
  %v823 = vrot.slane %v811, 7
  %v824 = vrot.slane %v812, 7
  %825 = vset.pattern.permute.xlu0 1
  %826 = vperm.xlu0 %825, %v813
  %v827 = vpop.permute.xlu0 %826
  %v829 = vmul.f32 %v827, %v823
  %v830 = vmul.f32 %v827, %v824
  %v831 = vadd.f32 %v821, %v829
  %v832 = vadd.f32 %v822, %v830
  %v833 = vrot.slane %v811, 6
  %v834 = vrot.slane %v812, 6
  %835 = vset.pattern.permute.xlu0 2
  %836 = vperm.xlu0 %835, %v813
  %v837 = vpop.permute.xlu0 %836
  %v839 = vmul.f32 %v837, %v833
  %v840 = vmul.f32 %v837, %v834
  %v841 = vadd.f32 %v831, %v839
  %v842 = vadd.f32 %v832, %v840
  %v843 = vrot.slane %v811, 5
  %v844 = vrot.slane %v812, 5
  %845 = vset.pattern.permute.xlu0 3
  %846 = vperm.xlu0 %845, %v813
  %v847 = vpop.permute.xlu0 %846
  %v849 = vmul.f32 %v847, %v843
  %v850 = vmul.f32 %v847, %v844
  %v851 = vadd.f32 %v841, %v849
  %v852 = vadd.f32 %v842, %v850
  %v853 = vrot.slane %v811, 3
  %v854 = vrot.slane %v812, 3
  %855 = vset.pattern.permute.xlu0 5
  %856 = vperm.xlu0 %855, %v813
  %v857 = vpop.permute.xlu0 %856
  %v859 = vmul.f32 %v857, %v853
  %v860 = vmul.f32 %v857, %v854
  %v861 = vadd.f32 %v851, %v859
  %v862 = vadd.f32 %v852, %v860
  %v863 = vrot.slane %v811, 2
  %v864 = vrot.slane %v812, 2
  %865 = vset.pattern.permute.xlu0 6
  %866 = vperm.xlu0 %865, %v813
  %v867 = vpop.permute.xlu0 %866
  %v869 = vmul.f32 %v867, %v863
  %v870 = vmul.f32 %v867, %v864
  %v871 = vadd.f32 %v861, %v869
  %v872 = vadd.f32 %v862, %v870
  %v873 = vrot.slane %v811, 1
  %v874 = vrot.slane %v812, 1
  %875 = vset.pattern.permute.xlu0 7
  %876 = vperm.xlu0 %875, %v813
  %v877 = vpop.permute.xlu0 %876
  %v879 = vmul.f32 %v877, %v873
  %v880 = vmul.f32 %v877, %v874
  %v881 = vadd.f32 %v871, %v879
  %v882 = vadd.f32 %v872, %v880
  %883 = vrot.lane.b32.xlu0 %v803, 16
  %v884 = vpop.permute.xlu0 %883
  %885 = vrot.lane.b32.xlu0 %v804, 16
  %v886 = vpop.permute.xlu0 %885
  %v887 = vsel %vm121, %v884, %v886
  %v888 = vsel %vm121, %v886, %v884
  %v889 = vmul.f32 %v115, %v888
  %v890 = vmul.f32 %v116, %v887
  %s891 = scalar_lea.vmem %s3, 8
  %v892 = vld [vmem:[%s891] sm:$0xff]
  %894 = vset.pattern.permute.xlu0 0
  %895 = vperm.xlu0 %894, %v892
  %v896 = vpop.permute.xlu0 %895
  %v898 = vmul.f32 %v896, %v889
  %v899 = vmul.f32 %v896, %v890
  %v900 = vadd.f32 %v881, %v898
  %v901 = vadd.f32 %v882, %v899
  %v902 = vrot.slane %v889, 7
  %v903 = vrot.slane %v890, 7
  %904 = vset.pattern.permute.xlu0 1
  %905 = vperm.xlu0 %904, %v892
  %v906 = vpop.permute.xlu0 %905
  %v908 = vmul.f32 %v906, %v902
  %v909 = vmul.f32 %v906, %v903
  %v910 = vadd.f32 %v900, %v908
  %v911 = vadd.f32 %v901, %v909
  %v912 = vrot.slane %v889, 6
  %v913 = vrot.slane %v890, 6
  %914 = vset.pattern.permute.xlu0 2
  %915 = vperm.xlu0 %914, %v892
  %v916 = vpop.permute.xlu0 %915
  %v918 = vmul.f32 %v916, %v912
  %v919 = vmul.f32 %v916, %v913
  %v920 = vadd.f32 %v910, %v918
  %v921 = vadd.f32 %v911, %v919
  %v922 = vrot.slane %v889, 5
  %v923 = vrot.slane %v890, 5
  %924 = vset.pattern.permute.xlu0 3
  %925 = vperm.xlu0 %924, %v892
  %v926 = vpop.permute.xlu0 %925
  %v928 = vmul.f32 %v926, %v922
  %v929 = vmul.f32 %v926, %v923
  %v930 = vadd.f32 %v920, %v928
  %v931 = vadd.f32 %v921, %v929
  %v932 = vrot.slane %v889, 3
  %v933 = vrot.slane %v890, 3
  %934 = vset.pattern.permute.xlu0 5
  %935 = vperm.xlu0 %934, %v892
  %v936 = vpop.permute.xlu0 %935
  %v938 = vmul.f32 %v936, %v932
  %v939 = vmul.f32 %v936, %v933
  %v940 = vadd.f32 %v930, %v938
  %v941 = vadd.f32 %v931, %v939
  %v942 = vrot.slane %v889, 2
  %v943 = vrot.slane %v890, 2
  %944 = vset.pattern.permute.xlu0 6
  %945 = vperm.xlu0 %944, %v892
  %v946 = vpop.permute.xlu0 %945
  %v948 = vmul.f32 %v946, %v942
  %v949 = vmul.f32 %v946, %v943
  %v950 = vadd.f32 %v940, %v948
  %v951 = vadd.f32 %v941, %v949
  %v952 = vrot.slane %v889, 1
  %v953 = vrot.slane %v890, 1
  %954 = vset.pattern.permute.xlu0 7
  %955 = vperm.xlu0 %954, %v892
  %v956 = vpop.permute.xlu0 %955
  %v958 = vmul.f32 %v956, %v952
  %v959 = vmul.f32 %v956, %v953
  %v960 = vadd.f32 %v950, %v958
  %v961 = vadd.f32 %v951, %v959
  %962 = vrot.lane.b32.xlu0 %v803, 15
  %v963 = vpop.permute.xlu0 %962
  %964 = vrot.lane.b32.xlu0 %v804, 15
  %v965 = vpop.permute.xlu0 %964
  %v966 = vsel %vm204, %v963, %v965
  %v967 = vsel %vm204, %v965, %v963
  %v968 = vmul.f32 %v198, %v967
  %v969 = vmul.f32 %v199, %v966
  %s970 = scalar_lea.vmem %s3, 16
  %v971 = vld [vmem:[%s970] sm:$0xff]
  %973 = vset.pattern.permute.xlu0 0
  %974 = vperm.xlu0 %973, %v971
  %v975 = vpop.permute.xlu0 %974
  %v977 = vmul.f32 %v975, %v968
  %v978 = vmul.f32 %v975, %v969
  %v979 = vadd.f32 %v960, %v977
  %v980 = vadd.f32 %v961, %v978
  %v981 = vrot.slane %v968, 7
  %v982 = vrot.slane %v969, 7
  %983 = vset.pattern.permute.xlu0 1
  %984 = vperm.xlu0 %983, %v971
  %v985 = vpop.permute.xlu0 %984
  %v987 = vmul.f32 %v985, %v981
  %v988 = vmul.f32 %v985, %v982
  %v989 = vadd.f32 %v979, %v987
  %v990 = vadd.f32 %v980, %v988
  %v991 = vrot.slane %v968, 6
  %v992 = vrot.slane %v969, 6
  %993 = vset.pattern.permute.xlu0 2
  %994 = vperm.xlu0 %993, %v971
  %v995 = vpop.permute.xlu0 %994
  %v997 = vmul.f32 %v995, %v991
  %v998 = vmul.f32 %v995, %v992
  %v999 = vadd.f32 %v989, %v997
  %v1000 = vadd.f32 %v990, %v998
  %v1001 = vrot.slane %v968, 5
  %v1002 = vrot.slane %v969, 5
  %1003 = vset.pattern.permute.xlu0 3
  %1004 = vperm.xlu0 %1003, %v971
  %v1005 = vpop.permute.xlu0 %1004
  %v1007 = vmul.f32 %v1005, %v1001
  %v1008 = vmul.f32 %v1005, %v1002
  %v1009 = vadd.f32 %v999, %v1007
  %v1010 = vadd.f32 %v1000, %v1008
  %v1011 = vrot.slane %v968, 3
  %v1012 = vrot.slane %v969, 3
  %1013 = vset.pattern.permute.xlu0 5
  %1014 = vperm.xlu0 %1013, %v971
  %v1015 = vpop.permute.xlu0 %1014
  %v1017 = vmul.f32 %v1015, %v1011
  %v1018 = vmul.f32 %v1015, %v1012
  %v1019 = vadd.f32 %v1009, %v1017
  %v1020 = vadd.f32 %v1010, %v1018
  %v1021 = vrot.slane %v968, 2
  %v1022 = vrot.slane %v969, 2
  %1023 = vset.pattern.permute.xlu0 6
  %1024 = vperm.xlu0 %1023, %v971
  %v1025 = vpop.permute.xlu0 %1024
  %v1027 = vmul.f32 %v1025, %v1021
  %v1028 = vmul.f32 %v1025, %v1022
  %v1029 = vadd.f32 %v1019, %v1027
  %v1030 = vadd.f32 %v1020, %v1028
  %v1031 = vrot.slane %v968, 1
  %v1032 = vrot.slane %v969, 1
  %1033 = vset.pattern.permute.xlu0 7
  %1034 = vperm.xlu0 %1033, %v971
  %v1035 = vpop.permute.xlu0 %1034
  %v1037 = vmul.f32 %v1035, %v1031
  %v1038 = vmul.f32 %v1035, %v1032
  %v1039 = vadd.f32 %v1029, %v1037
  %v1040 = vadd.f32 %v1030, %v1038
  %1041 = vrot.lane.b32.xlu0 %v803, 1
  %v1042 = vpop.permute.xlu0 %1041
  %1043 = vrot.lane.b32.xlu0 %v804, 1
  %v1044 = vpop.permute.xlu0 %1043
  %v1045 = vsel %vm287, %v1042, %v1044
  %v1046 = vsel %vm287, %v1044, %v1042
  %v1047 = vmul.f32 %v281, %v1046
  %v1048 = vmul.f32 %v282, %v1045
  %s1049 = scalar_lea.vmem %s3, 24
  %v1050 = vld [vmem:[%s1049] sm:$0xff]
  %1052 = vset.pattern.permute.xlu0 0
  %1053 = vperm.xlu0 %1052, %v1050
  %v1054 = vpop.permute.xlu0 %1053
  %v1056 = vmul.f32 %v1054, %v1047
  %v1057 = vmul.f32 %v1054, %v1048
  %v1058 = vadd.f32 %v1039, %v1056
  %v1059 = vadd.f32 %v1040, %v1057
  %v1060 = vrot.slane %v1047, 7
  %v1061 = vrot.slane %v1048, 7
  %1062 = vset.pattern.permute.xlu0 1
  %1063 = vperm.xlu0 %1062, %v1050
  %v1064 = vpop.permute.xlu0 %1063
  %v1066 = vmul.f32 %v1064, %v1060
  %v1067 = vmul.f32 %v1064, %v1061
  %v1068 = vadd.f32 %v1058, %v1066
  %v1069 = vadd.f32 %v1059, %v1067
  %v1070 = vrot.slane %v1047, 6
  %v1071 = vrot.slane %v1048, 6
  %1072 = vset.pattern.permute.xlu0 2
  %1073 = vperm.xlu0 %1072, %v1050
  %v1074 = vpop.permute.xlu0 %1073
  %v1076 = vmul.f32 %v1074, %v1070
  %v1077 = vmul.f32 %v1074, %v1071
  %v1078 = vadd.f32 %v1068, %v1076
  %v1079 = vadd.f32 %v1069, %v1077
  %v1080 = vrot.slane %v1047, 5
  %v1081 = vrot.slane %v1048, 5
  %1082 = vset.pattern.permute.xlu0 3
  %1083 = vperm.xlu0 %1082, %v1050
  %v1084 = vpop.permute.xlu0 %1083
  %v1086 = vmul.f32 %v1084, %v1080
  %v1087 = vmul.f32 %v1084, %v1081
  %v1088 = vadd.f32 %v1078, %v1086
  %v1089 = vadd.f32 %v1079, %v1087
  %v1090 = vrot.slane %v1047, 3
  %v1091 = vrot.slane %v1048, 3
  %1092 = vset.pattern.permute.xlu0 5
  %1093 = vperm.xlu0 %1092, %v1050
  %v1094 = vpop.permute.xlu0 %1093
  %v1096 = vmul.f32 %v1094, %v1090
  %v1097 = vmul.f32 %v1094, %v1091
  %v1098 = vadd.f32 %v1088, %v1096
  %v1099 = vadd.f32 %v1089, %v1097
  %v1100 = vrot.slane %v1047, 2
  %v1101 = vrot.slane %v1048, 2
  %1102 = vset.pattern.permute.xlu0 6
  %1103 = vperm.xlu0 %1102, %v1050
  %v1104 = vpop.permute.xlu0 %1103
  %v1106 = vmul.f32 %v1104, %v1100
  %v1107 = vmul.f32 %v1104, %v1101
  %v1108 = vadd.f32 %v1098, %v1106
  %v1109 = vadd.f32 %v1099, %v1107
  %v1110 = vrot.slane %v1047, 1
  %v1111 = vrot.slane %v1048, 1
  %1112 = vset.pattern.permute.xlu0 7
  %1113 = vperm.xlu0 %1112, %v1050
  %v1114 = vpop.permute.xlu0 %1113
  %v1116 = vmul.f32 %v1114, %v1110
  %v1117 = vmul.f32 %v1114, %v1111
  %v1118 = vadd.f32 %v1108, %v1116
  %v1119 = vadd.f32 %v1109, %v1117
  %s1120 = scalar_lea.vmem %s3, 32
  %v1121 = vld [vmem:[%s1120] sm:$0xff]
  %1123 = vset.pattern.permute.xlu0 0
  %1124 = vperm.xlu0 %1123, %v1121
  %v1125 = vpop.permute.xlu0 %1124
  %v1127 = vmul.f32 %v1125, %v803
  %v1128 = vmul.f32 %v1125, %v804
  %v1129 = vadd.f32 %v1118, %v1127
  %v1130 = vadd.f32 %v1119, %v1128
  %v1131 = vrot.slane %v803, 7
  %v1132 = vrot.slane %v804, 7
  %1133 = vset.pattern.permute.xlu0 1
  %1134 = vperm.xlu0 %1133, %v1121
  %v1135 = vpop.permute.xlu0 %1134
  %v1137 = vmul.f32 %v1135, %v1131
  %v1138 = vmul.f32 %v1135, %v1132
  %v1139 = vadd.f32 %v1129, %v1137
  %v1140 = vadd.f32 %v1130, %v1138
  %v1141 = vrot.slane %v803, 6
  %v1142 = vrot.slane %v804, 6
  %1143 = vset.pattern.permute.xlu0 2
  %1144 = vperm.xlu0 %1143, %v1121
  %v1145 = vpop.permute.xlu0 %1144
  %v1147 = vmul.f32 %v1145, %v1141
  %v1148 = vmul.f32 %v1145, %v1142
  %v1149 = vadd.f32 %v1139, %v1147
  %v1150 = vadd.f32 %v1140, %v1148
  %v1151 = vrot.slane %v803, 5
  %v1152 = vrot.slane %v804, 5
  %1153 = vset.pattern.permute.xlu0 3
  %1154 = vperm.xlu0 %1153, %v1121
  %v1155 = vpop.permute.xlu0 %1154
  %v1157 = vmul.f32 %v1155, %v1151
  %v1158 = vmul.f32 %v1155, %v1152
  %v1159 = vadd.f32 %v1149, %v1157
  %v1160 = vadd.f32 %v1150, %v1158
  %v1161 = vrot.slane %v803, 3
  %v1162 = vrot.slane %v804, 3
  %1163 = vset.pattern.permute.xlu0 5
  %1164 = vperm.xlu0 %1163, %v1121
  %v1165 = vpop.permute.xlu0 %1164
  %v1167 = vmul.f32 %v1165, %v1161
  %v1168 = vmul.f32 %v1165, %v1162
  %v1169 = vadd.f32 %v1159, %v1167
  %v1170 = vadd.f32 %v1160, %v1168
  %v1171 = vrot.slane %v803, 2
  %v1172 = vrot.slane %v804, 2
  %1173 = vset.pattern.permute.xlu0 6
  %1174 = vperm.xlu0 %1173, %v1121
  %v1175 = vpop.permute.xlu0 %1174
  %v1177 = vmul.f32 %v1175, %v1171
  %v1178 = vmul.f32 %v1175, %v1172
  %v1179 = vadd.f32 %v1169, %v1177
  %v1180 = vadd.f32 %v1170, %v1178
  %v1181 = vrot.slane %v803, 1
  %v1182 = vrot.slane %v804, 1
  %1183 = vset.pattern.permute.xlu0 7
  %1184 = vperm.xlu0 %1183, %v1121
  %v1185 = vpop.permute.xlu0 %1184
  %v1187 = vmul.f32 %v1185, %v1181
  %v1188 = vmul.f32 %v1185, %v1182
  %v1189 = vadd.f32 %v1179, %v1187
  %v1190 = vadd.f32 %v1180, %v1188
  %1191 = vrot.lane.b32.xlu0 %v803, 127
  %v1192 = vpop.permute.xlu0 %1191
  %1193 = vrot.lane.b32.xlu0 %v804, 127
  %v1194 = vpop.permute.xlu0 %1193
  %v1195 = vsel %vm441, %v1192, %v1194
  %v1196 = vsel %vm441, %v1194, %v1192
  %v1197 = vmul.f32 %v435, %v1195
  %v1198 = vmul.f32 %v436, %v1196
  %s1199 = scalar_lea.vmem %s3, 40
  %v1200 = vld [vmem:[%s1199] sm:$0xff]
  %1202 = vset.pattern.permute.xlu0 0
  %1203 = vperm.xlu0 %1202, %v1200
  %v1204 = vpop.permute.xlu0 %1203
  %v1206 = vmul.f32 %v1204, %v1197
  %v1207 = vmul.f32 %v1204, %v1198
  %v1208 = vadd.f32 %v1189, %v1206
  %v1209 = vadd.f32 %v1190, %v1207
  %v1210 = vrot.slane %v1197, 7
  %v1211 = vrot.slane %v1198, 7
  %1212 = vset.pattern.permute.xlu0 1
  %1213 = vperm.xlu0 %1212, %v1200
  %v1214 = vpop.permute.xlu0 %1213
  %v1216 = vmul.f32 %v1214, %v1210
  %v1217 = vmul.f32 %v1214, %v1211
  %v1218 = vadd.f32 %v1208, %v1216
  %v1219 = vadd.f32 %v1209, %v1217
  %v1220 = vrot.slane %v1197, 6
  %v1221 = vrot.slane %v1198, 6
  %1222 = vset.pattern.permute.xlu0 2
  %1223 = vperm.xlu0 %1222, %v1200
  %v1224 = vpop.permute.xlu0 %1223
  %v1226 = vmul.f32 %v1224, %v1220
  %v1227 = vmul.f32 %v1224, %v1221
  %v1228 = vadd.f32 %v1218, %v1226
  %v1229 = vadd.f32 %v1219, %v1227
  %v1230 = vrot.slane %v1197, 5
  %v1231 = vrot.slane %v1198, 5
  %1232 = vset.pattern.permute.xlu0 3
  %1233 = vperm.xlu0 %1232, %v1200
  %v1234 = vpop.permute.xlu0 %1233
  %v1236 = vmul.f32 %v1234, %v1230
  %v1237 = vmul.f32 %v1234, %v1231
  %v1238 = vadd.f32 %v1228, %v1236
  %v1239 = vadd.f32 %v1229, %v1237
  %v1240 = vrot.slane %v1197, 3
  %v1241 = vrot.slane %v1198, 3
  %1242 = vset.pattern.permute.xlu0 5
  %1243 = vperm.xlu0 %1242, %v1200
  %v1244 = vpop.permute.xlu0 %1243
  %v1246 = vmul.f32 %v1244, %v1240
  %v1247 = vmul.f32 %v1244, %v1241
  %v1248 = vadd.f32 %v1238, %v1246
  %v1249 = vadd.f32 %v1239, %v1247
  %v1250 = vrot.slane %v1197, 2
  %v1251 = vrot.slane %v1198, 2
  %1252 = vset.pattern.permute.xlu0 6
  %1253 = vperm.xlu0 %1252, %v1200
  %v1254 = vpop.permute.xlu0 %1253
  %v1256 = vmul.f32 %v1254, %v1250
  %v1257 = vmul.f32 %v1254, %v1251
  %v1258 = vadd.f32 %v1248, %v1256
  %v1259 = vadd.f32 %v1249, %v1257
  %v1260 = vrot.slane %v1197, 1
  %v1261 = vrot.slane %v1198, 1
  %1262 = vset.pattern.permute.xlu0 7
  %1263 = vperm.xlu0 %1262, %v1200
  %v1264 = vpop.permute.xlu0 %1263
  %v1266 = vmul.f32 %v1264, %v1260
  %v1267 = vmul.f32 %v1264, %v1261
  %v1268 = vadd.f32 %v1258, %v1266
  %v1269 = vadd.f32 %v1259, %v1267
  %1270 = vrot.lane.b32.xlu0 %v803, 113
  %v1271 = vpop.permute.xlu0 %1270
  %1272 = vrot.lane.b32.xlu0 %v804, 113
  %v1273 = vpop.permute.xlu0 %1272
  %v1274 = vsel %vm524, %v1271, %v1273
  %v1275 = vsel %vm524, %v1273, %v1271
  %v1276 = vmul.f32 %v518, %v1274
  %v1277 = vmul.f32 %v519, %v1275
  %s1278 = scalar_lea.vmem %s3, 48
  %v1279 = vld [vmem:[%s1278] sm:$0xff]
  %1281 = vset.pattern.permute.xlu0 0
  %1282 = vperm.xlu0 %1281, %v1279
  %v1283 = vpop.permute.xlu0 %1282
  %v1285 = vmul.f32 %v1283, %v1276
  %v1286 = vmul.f32 %v1283, %v1277
  %v1287 = vadd.f32 %v1268, %v1285
  %v1288 = vadd.f32 %v1269, %v1286
  %v1289 = vrot.slane %v1276, 7
  %v1290 = vrot.slane %v1277, 7
  %1291 = vset.pattern.permute.xlu0 1
  %1292 = vperm.xlu0 %1291, %v1279
  %v1293 = vpop.permute.xlu0 %1292
  %v1295 = vmul.f32 %v1293, %v1289
  %v1296 = vmul.f32 %v1293, %v1290
  %v1297 = vadd.f32 %v1287, %v1295
  %v1298 = vadd.f32 %v1288, %v1296
  %v1299 = vrot.slane %v1276, 6
  %v1300 = vrot.slane %v1277, 6
  %1301 = vset.pattern.permute.xlu0 2
  %1302 = vperm.xlu0 %1301, %v1279
  %v1303 = vpop.permute.xlu0 %1302
  %v1305 = vmul.f32 %v1303, %v1299
  %v1306 = vmul.f32 %v1303, %v1300
  %v1307 = vadd.f32 %v1297, %v1305
  %v1308 = vadd.f32 %v1298, %v1306
  %v1309 = vrot.slane %v1276, 5
  %v1310 = vrot.slane %v1277, 5
  %1311 = vset.pattern.permute.xlu0 3
  %1312 = vperm.xlu0 %1311, %v1279
  %v1313 = vpop.permute.xlu0 %1312
  %v1315 = vmul.f32 %v1313, %v1309
  %v1316 = vmul.f32 %v1313, %v1310
  %v1317 = vadd.f32 %v1307, %v1315
  %v1318 = vadd.f32 %v1308, %v1316
  %v1319 = vrot.slane %v1276, 3
  %v1320 = vrot.slane %v1277, 3
  %1321 = vset.pattern.permute.xlu0 5
  %1322 = vperm.xlu0 %1321, %v1279
  %v1323 = vpop.permute.xlu0 %1322
  %v1325 = vmul.f32 %v1323, %v1319
  %v1326 = vmul.f32 %v1323, %v1320
  %v1327 = vadd.f32 %v1317, %v1325
  %v1328 = vadd.f32 %v1318, %v1326
  %v1329 = vrot.slane %v1276, 2
  %v1330 = vrot.slane %v1277, 2
  %1331 = vset.pattern.permute.xlu0 6
  %1332 = vperm.xlu0 %1331, %v1279
  %v1333 = vpop.permute.xlu0 %1332
  %v1335 = vmul.f32 %v1333, %v1329
  %v1336 = vmul.f32 %v1333, %v1330
  %v1337 = vadd.f32 %v1327, %v1335
  %v1338 = vadd.f32 %v1328, %v1336
  %v1339 = vrot.slane %v1276, 1
  %v1340 = vrot.slane %v1277, 1
  %1341 = vset.pattern.permute.xlu0 7
  %1342 = vperm.xlu0 %1341, %v1279
  %v1343 = vpop.permute.xlu0 %1342
  %v1345 = vmul.f32 %v1343, %v1339
  %v1346 = vmul.f32 %v1343, %v1340
  %v1347 = vadd.f32 %v1337, %v1345
  %v1348 = vadd.f32 %v1338, %v1346
  %1349 = vrot.lane.b32.xlu0 %v803, 112
  %v1350 = vpop.permute.xlu0 %1349
  %1351 = vrot.lane.b32.xlu0 %v804, 112
  %v1352 = vpop.permute.xlu0 %1351
  %v1353 = vsel %vm607, %v1350, %v1352
  %v1354 = vsel %vm607, %v1352, %v1350
  %v1355 = vmul.f32 %v601, %v1353
  %v1356 = vmul.f32 %v602, %v1354
  %s1357 = scalar_lea.vmem %s3, 56
  %v1358 = vld [vmem:[%s1357] sm:$0xff]
  %1360 = vset.pattern.permute.xlu0 0
  %1361 = vperm.xlu0 %1360, %v1358
  %v1362 = vpop.permute.xlu0 %1361
  %v1364 = vmul.f32 %v1362, %v1355
  %v1365 = vmul.f32 %v1362, %v1356
  %v1366 = vadd.f32 %v1347, %v1364
  %v1367 = vadd.f32 %v1348, %v1365
  %v1368 = vrot.slane %v1355, 7
  %v1369 = vrot.slane %v1356, 7
  %1370 = vset.pattern.permute.xlu0 1
  %1371 = vperm.xlu0 %1370, %v1358
  %v1372 = vpop.permute.xlu0 %1371
  %v1374 = vmul.f32 %v1372, %v1368
  %v1375 = vmul.f32 %v1372, %v1369
  %v1376 = vadd.f32 %v1366, %v1374
  %v1377 = vadd.f32 %v1367, %v1375
  %v1378 = vrot.slane %v1355, 6
  %v1379 = vrot.slane %v1356, 6
  %1380 = vset.pattern.permute.xlu0 2
  %1381 = vperm.xlu0 %1380, %v1358
  %v1382 = vpop.permute.xlu0 %1381
  %v1384 = vmul.f32 %v1382, %v1378
  %v1385 = vmul.f32 %v1382, %v1379
  %v1386 = vadd.f32 %v1376, %v1384
  %v1387 = vadd.f32 %v1377, %v1385
  %v1388 = vrot.slane %v1355, 5
  %v1389 = vrot.slane %v1356, 5
  %1390 = vset.pattern.permute.xlu0 3
  %1391 = vperm.xlu0 %1390, %v1358
  %v1392 = vpop.permute.xlu0 %1391
  %v1394 = vmul.f32 %v1392, %v1388
  %v1395 = vmul.f32 %v1392, %v1389
  %v1396 = vadd.f32 %v1386, %v1394
  %v1397 = vadd.f32 %v1387, %v1395
  %v1398 = vrot.slane %v1355, 3
  %v1399 = vrot.slane %v1356, 3
  %1400 = vset.pattern.permute.xlu0 5
  %1401 = vperm.xlu0 %1400, %v1358
  %v1402 = vpop.permute.xlu0 %1401
  %v1404 = vmul.f32 %v1402, %v1398
  %v1405 = vmul.f32 %v1402, %v1399
  %v1406 = vadd.f32 %v1396, %v1404
  %v1407 = vadd.f32 %v1397, %v1405
  %v1408 = vrot.slane %v1355, 2
  %v1409 = vrot.slane %v1356, 2
  %1410 = vset.pattern.permute.xlu0 6
  %1411 = vperm.xlu0 %1410, %v1358
  %v1412 = vpop.permute.xlu0 %1411
  %v1414 = vmul.f32 %v1412, %v1408
  %v1415 = vmul.f32 %v1412, %v1409
  %v1416 = vadd.f32 %v1406, %v1414
  %v1417 = vadd.f32 %v1407, %v1415
  %v1418 = vrot.slane %v1355, 1
  %v1419 = vrot.slane %v1356, 1
  %1420 = vset.pattern.permute.xlu0 7
  %1421 = vperm.xlu0 %1420, %v1358
  %v1422 = vpop.permute.xlu0 %1421
  %v1424 = vmul.f32 %v1422, %v1418
  %v1425 = vmul.f32 %v1422, %v1419
  %v1426 = vadd.f32 %v1416, %v1424
  %v1427 = vadd.f32 %v1417, %v1425
  %1428 = vrot.lane.b32.xlu0 %v803, 111
  %v1429 = vpop.permute.xlu0 %1428
  %1430 = vrot.lane.b32.xlu0 %v804, 111
  %v1431 = vpop.permute.xlu0 %1430
  %v1432 = vsel %vm690, %v1429, %v1431
  %v1433 = vsel %vm690, %v1431, %v1429
  %v1434 = vmul.f32 %v684, %v1432
  %v1435 = vmul.f32 %v685, %v1433
  %s1436 = scalar_lea.vmem %s3, 64
  %v1437 = vld [vmem:[%s1436] sm:$0xff]
  %1439 = vset.pattern.permute.xlu0 0
  %1440 = vperm.xlu0 %1439, %v1437
  %v1441 = vpop.permute.xlu0 %1440
  %v1443 = vmul.f32 %v1441, %v1434
  %v1444 = vmul.f32 %v1441, %v1435
  %v1445 = vadd.f32 %v1426, %v1443
  %v1446 = vadd.f32 %v1427, %v1444
  %v1447 = vrot.slane %v1434, 7
  %v1448 = vrot.slane %v1435, 7
  %1449 = vset.pattern.permute.xlu0 1
  %1450 = vperm.xlu0 %1449, %v1437
  %v1451 = vpop.permute.xlu0 %1450
  %v1453 = vmul.f32 %v1451, %v1447
  %v1454 = vmul.f32 %v1451, %v1448
  %v1455 = vadd.f32 %v1445, %v1453
  %v1456 = vadd.f32 %v1446, %v1454
  %v1457 = vrot.slane %v1434, 6
  %v1458 = vrot.slane %v1435, 6
  %1459 = vset.pattern.permute.xlu0 2
  %1460 = vperm.xlu0 %1459, %v1437
  %v1461 = vpop.permute.xlu0 %1460
  %v1463 = vmul.f32 %v1461, %v1457
  %v1464 = vmul.f32 %v1461, %v1458
  %v1465 = vadd.f32 %v1455, %v1463
  %v1466 = vadd.f32 %v1456, %v1464
  %v1467 = vrot.slane %v1434, 5
  %v1468 = vrot.slane %v1435, 5
  %1469 = vset.pattern.permute.xlu0 3
  %1470 = vperm.xlu0 %1469, %v1437
  %v1471 = vpop.permute.xlu0 %1470
  %v1473 = vmul.f32 %v1471, %v1467
  %v1474 = vmul.f32 %v1471, %v1468
  %v1475 = vadd.f32 %v1465, %v1473
  %v1476 = vadd.f32 %v1466, %v1474
  %v1477 = vrot.slane %v1434, 3
  %v1478 = vrot.slane %v1435, 3
  %1479 = vset.pattern.permute.xlu0 5
  %1480 = vperm.xlu0 %1479, %v1437
  %v1481 = vpop.permute.xlu0 %1480
  %v1483 = vmul.f32 %v1481, %v1477
  %v1484 = vmul.f32 %v1481, %v1478
  %v1485 = vadd.f32 %v1475, %v1483
  %v1486 = vadd.f32 %v1476, %v1484
  %v1487 = vrot.slane %v1434, 2
  %v1488 = vrot.slane %v1435, 2
  %1489 = vset.pattern.permute.xlu0 6
  %1490 = vperm.xlu0 %1489, %v1437
  %v1491 = vpop.permute.xlu0 %1490
  %v1493 = vmul.f32 %v1491, %v1487
  %v1494 = vmul.f32 %v1491, %v1488
  %v1495 = vadd.f32 %v1485, %v1493
  %v1496 = vadd.f32 %v1486, %v1494
  %v1497 = vrot.slane %v1434, 1
  %v1498 = vrot.slane %v1435, 1
  %1499 = vset.pattern.permute.xlu0 7
  %1500 = vperm.xlu0 %1499, %v1437
  %v1501 = vpop.permute.xlu0 %1500
  %v1503 = vmul.f32 %v1501, %v1497
  %v1504 = vmul.f32 %v1501, %v1498
  %v1505 = vadd.f32 %v1495, %v1503
  %v1506 = vadd.f32 %v1496, %v1504
  %v1507 = vadd.f32 %v1505, %v1506
  %1508 = vadd.xlane.f32.xlu0 %v1507
  %v1509 = vpop.xlane.xlu0 %1508
  %v1510 = vmul.f32 %v1505, %v1505
  %v1511 = vmul.f32 %v1506, %v1506
  %v1512 = vadd.f32 %v1510, %v1511
  %1513 = vadd.xlane.f32.xlu0 %v1512
  %v1514 = vpop.xlane.xlu0 %1513
  %v1515 = vrot.slane %v1509, 4
  %v1516 = vadd.f32 %v1509, %v1515
  %v1517 = vrot.slane %v1514, 4
  %v1518 = vadd.f32 %v1514, %v1517
  %v1519 = vmul.f32 %v1516, 0.001953125
  %v1520 = vmul.f32 %v1518, 0.001953125
  %v1521 = vmul.f32 %v1519, %v1519
  %v1522 = vsub.f32 %v1520, %v1521
  %v1523 = vld [vmem:[%s6] sm:$0xff]
  %v1524 = vadd.f32 %v1522, 1e-05
  %v1525 = vrsqrt.pop %v1524
  %v1526 = vmul.f32 %v1523, %v1525
  %v1527 = vld [vmem:[%s7] sm:$0xff]
  %v1528 = vmul.f32 %v1519, %v1526
  %v1529 = vsub.f32 %v1527, %v1528
  %1531 = vset.pattern.permute.xlu0 0
  %1532 = vperm.xlu0 %1531, %v1526
  %v1533 = vpop.permute.xlu0 %1532
  %v1535 = vmul.f32 %v1505, %v1533
  %v1536 = vmul.f32 %v1506, %v1533
  %1538 = vset.pattern.permute.xlu0 0
  %1539 = vperm.xlu0 %1538, %v1529
  %v1540 = vpop.permute.xlu0 %1539
  %v1542 = vadd.f32 %v1535, %v1540
  %v1543 = vadd.f32 %v1536, %v1540
  %v1544 = vadd.f32 %v1542, %v29
  %v1545 = vadd.f32 %v1543, %v30
  %v1546 = vmax.f32 %v1544, 0.0
  %v1547 = vmax.f32 %v1545, 0.0
  %1548 = vst [vmem:[%s8] sm:$0xff] %v1546
  %1549 = vst [vmem:[%s8 + $0x8] sm:$0xff] %v1547
  // Predicated region
  $region34: #{basic_block_forward.1} parent=0 // pred_check
    _
  $region35: #{basic_block_forward.1} parent=0 // pred_check_branch
    %1551 = sbr.rel (0) target = $region37
  $region36: #{basic_block_forward.1} parent=0 // pred_region
    _
  $region37: #{basic_block_forward.1} parent=0 // pred_fallthru
    _
  // Predicated region
  $region38: #{basic_block_forward.1} parent=0 // pred_check
    _
  $region39: #{basic_block_forward.1} parent=0 // pred_check_branch
    %1553 = sbr.rel (0) target = $region41
  $region40: #{basic_block_forward.1} parent=0 // pred_region
    _
  $region41: #{basic_block_forward.1} parent=0 // pred_fallthru
    _

</llo_original>
